<compile_context>
chip_gen: v5e
topology: v5e:2x2
jax: 0.10.0
libtpu: 0.0.40
codegen_flags: <defaults>
</compile_context>

<pallas_src>
import math

import jax
import jax.numpy as jnp
from jax.experimental import pallas as pl
from jax.experimental.pallas import tpu as pltpu

EPS = 1e-5


def _make_kernel(n_real, n_pad):
    """Kernel factory (closes over the real / padded batch sizes)."""
    inv_n = 1.0 / float(n_real)
    needs_mask = n_real != n_pad

    def kernel(x_ref, w1_ref, p1_ref, w2_hbm, p2_ref, w3_hbm, p3_ref,
               w4_hbm, b4_ref, o_ref,
               w2_v, w3_v, w4_v, dma_sem,
               a1, a2, a3, s1, s2, s3):
        l = pl.program_id(0)            # layer phase 0..3 (outer, sequential)
        i = pl.program_id(1)            # batch tile (inner)
        tm = x_ref.shape[0]
        row0 = pl.multiple_of(i * tm, tm)

        # --- prologue: kick off async weight fetches for later layers so the
        # fc2/fc3/out weight DMA is hidden behind the fc1 (and later) compute.
        @pl.when((l == 0) & (i == 0))
        def _():
            pltpu.make_async_copy(w2_hbm, w2_v, dma_sem.at[0]).start()
            pltpu.make_async_copy(w3_hbm, w3_v, dma_sem.at[1]).start()
            pltpu.make_async_copy(w4_hbm, w4_v, dma_sem.at[2]).start()

        def masked(y):
            # Exclude padded rows from BatchNorm statistics.
            if not needs_mask:
                return y
            row_ids = row0 + jax.lax.broadcasted_iota(
                jnp.int32, (y.shape[0], 1), 0)
            return jnp.where(row_ids < n_real, y, 0.0)

        def accumulate(s_ref, y):
            # Cross-tile accumulation of [sum; sum_sq] (single-pass variance).
            @pl.when(i == 0)
            def _():
                s_ref[...] = jnp.zeros_like(s_ref)
            ym = masked(y)
            s_ref[0:1, :] += jnp.sum(ym, axis=0, keepdims=True)
            s_ref[1:2, :] += jnp.sum(ym * ym, axis=0, keepdims=True)

        def bn_scale_shift(s_ref, p_ref):
            # Train-mode BatchNorm1d folded to one scale/shift (biased var).
            mean = s_ref[0:1, :] * inv_n
            var = s_ref[1:2, :] * inv_n - mean * mean
            scale = p_ref[1:2, :] * jax.lax.rsqrt(var + EPS)   # rsqrt -> EUP
            shift = p_ref[2:3, :] - mean * scale
            return scale, shift

        # ---- phase 0: fc1 + relu, stash raw activations + stats ----
        @pl.when(l == 0)
        def _():
            h = x_ref[...].astype(jnp.bfloat16)
            y = jnp.dot(h, w1_ref[...],
                        preferred_element_type=jnp.float32) + p1_ref[0:1, :]
            y = jnp.maximum(y, 0.0)
            a1[pl.ds(row0, tm), :] = y
            accumulate(s1, y)

        # ---- phase 1: bn1 -> fc2 + relu ----
        @pl.when(l == 1)
        def _():
            @pl.when(i == 0)
            def _():
                pltpu.make_async_copy(w2_hbm, w2_v, dma_sem.at[0]).wait()
            scale, shift = bn_scale_shift(s1, p1_ref)
            # BN scale/shift fused with the bf16 cast feeding the matmul.
            h = (a1[pl.ds(row0, tm), :] * scale + shift).astype(jnp.bfloat16)
            y = jnp.dot(h, w2_v[...],
                        preferred_element_type=jnp.float32) + p2_ref[0:1, :]
            y = jnp.maximum(y, 0.0)
            a2[pl.ds(row0, tm), :] = y
            accumulate(s2, y)

        # ---- phase 2: bn2 -> fc3 + relu ----
        @pl.when(l == 2)
        def _():
            @pl.when(i == 0)
            def _():
                pltpu.make_async_copy(w3_hbm, w3_v, dma_sem.at[1]).wait()
            scale, shift = bn_scale_shift(s2, p2_ref)
            h = (a2[pl.ds(row0, tm), :] * scale + shift).astype(jnp.bfloat16)
            y = jnp.dot(h, w3_v[...],
                        preferred_element_type=jnp.float32) + p3_ref[0:1, :]
            y = jnp.maximum(y, 0.0)
            a3[pl.ds(row0, tm), :] = y
            accumulate(s3, y)

        # ---- phase 3: bn3 -> out linear (lane-dense padded output) ----
        @pl.when(l == 3)
        def _():
            @pl.when(i == 0)
            def _():
                pltpu.make_async_copy(w4_hbm, w4_v, dma_sem.at[2]).wait()
            scale, shift = bn_scale_shift(s3, p3_ref)
            h = (a3[pl.ds(row0, tm), :] * scale + shift).astype(jnp.bfloat16)
            y = jnp.dot(h, w4_v[...],
                        preferred_element_type=jnp.float32) + b4_ref[...]
            o_ref[...] = y.astype(o_ref.dtype)

    return kernel


def _cost_estimate(n, in_f, h1, h2, h3, out_pad):
    mm = in_f * h1 + h1 * h2 + h2 * h3 + h3 * out_pad
    return pl.CostEstimate(
        flops=2 * n * mm,
        transcendentals=h1 + h2 + h3,                     # one rsqrt per BN feature
        bytes_accessed=(n * in_f * 4 + n * out_pad * 4    # x + padded output
                        + 2 * mm                          # bf16 weights
                        + 4 * (3 * (h1 + h2 + h3) + out_pad)))


def mlp_forward(x, params):
    """x: [N, in_features] f32.
    params: [w1(bf16 in x h1), p1(f32 3 x h1: bias/gamma/beta), w2, p2,
             w3, p3, w4(bf16 h3 x out), b4(f32 1 x out)]."""
    n, in_f = x.shape
    w1, p1, w2, p2, w3, p3, w4, b4 = params
    h1, h2, h3 = w1.shape[1], w2.shape[1], w3.shape[1]
    out_features = w4.shape[1]

    # Lane-dense output: pad final layer to a multiple of 128 lanes so the
    # output store is an unmasked vst; slice back to out_features outside.
    out_pad = max(128, pl.cdiv(out_features, 128) * 128)
    if out_pad != out_features:
        w4 = jnp.pad(w4, ((0, 0), (0, out_pad - out_features)))
        b4 = jnp.pad(b4, ((0, 0), (0, out_pad - out_features)))

    # Batch tiling: whole (sublane-padded) batch if small, else 256-row tiles.
    if n <= 256:
        n_pad = max(8, ((n + 7) // 8) * 8)
        tm = n_pad
    else:
        tm = 256
        n_pad = pl.cdiv(n, tm) * tm
    if n_pad != n:
        x = jnp.pad(x, ((0, n_pad - n), (0, 0)))
    num_tiles = n_pad // tm

    # VMEM budget guard: whole-batch activations stay resident for exact
    # full-batch BatchNorm statistics.  v7x: 64 MiB physical / 32 MiB default
    # scoped; v5e default scoped limit is 16 MiB.
    act_bytes = n_pad * (h1 + h2 + h3) * 4
    weight_bytes = 2 * (in_f * h1 + h1 * h2 + h2 * h3 + h3 * out_pad)
    io_bytes = 2 * 2 * tm * (in_f + out_pad) * 4       # double-buffered x/out
    vmem_needed = act_bytes + weight_bytes + io_bytes + (1 << 20)
    vmem_budget = 48 << 20                              # safe on v5e/v6e/v7x
    if vmem_needed > vmem_budget:
        raise ValueError(
            f"batch={n} needs ~{vmem_needed >> 20} MiB of VMEM for whole-batch "
            f"BatchNorm statistics; exceeds the {vmem_budget >> 20} MiB budget "
            "(halve the batch, especially on v7x's 64 MiB VMEM).")
    vmem_limit = vmem_budget if vmem_needed > (16 << 20) else None

    const = lambda l, i: (0, 0)   # resident block across the whole grid
    grid_spec = pltpu.PrefetchScalarGridSpec(
        num_scalar_prefetch=0,
        grid=(4, num_tiles),
        in_specs=[
            pl.BlockSpec((tm, in_f), lambda l, i: (i, 0)),   # x (batch-tiled)
            pl.BlockSpec((in_f, h1), const),                 # w1 (resident)
            pl.BlockSpec((3, h1), const),                    # bias/gamma/beta 1
            pl.BlockSpec(memory_space=pl.ANY),               # w2 (manual DMA)
            pl.BlockSpec((3, h2), const),                    # bias/gamma/beta 2
            pl.BlockSpec(memory_space=pl.ANY),               # w3 (manual DMA)
            pl.BlockSpec((3, h3), const),                    # bias/gamma/beta 3
            pl.BlockSpec(memory_space=pl.ANY),               # w4 (manual DMA)
            pl.BlockSpec((1, out_pad), const),               # b4
        ],
        out_specs=pl.BlockSpec((tm, out_pad), lambda l, i: (i, 0)),
        scratch_shapes=[
            pltpu.VMEM((h1, h2), jnp.bfloat16),        # w2 landing buffer
            pltpu.VMEM((h2, h3), jnp.bfloat16),        # w3 landing buffer
            pltpu.VMEM((h3, out_pad), jnp.bfloat16),   # w4 landing buffer
            pltpu.SemaphoreType.DMA((3,)),
            pltpu.VMEM((n_pad, h1), jnp.float32),      # raw relu(fc1) acts
            pltpu.VMEM((n_pad, h2), jnp.float32),      # raw relu(fc2) acts
            pltpu.VMEM((n_pad, h3), jnp.float32),      # raw relu(fc3) acts
            pltpu.VMEM((2, h1), jnp.float32),          # [sum; sum_sq] bn1
            pltpu.VMEM((2, h2), jnp.float32),          # [sum; sum_sq] bn2
            pltpu.VMEM((2, h3), jnp.float32),          # [sum; sum_sq] bn3
        ],
    )

    out = pl.pallas_call(
        _make_kernel(n, n_pad),
        out_shape=jax.ShapeDtypeStruct((n_pad, out_pad), jnp.float32),
        grid_spec=grid_spec,
        compiler_params=pltpu.CompilerParams(
            # Layer axis is a true sequential dependency; the batch-tile axis
            # stays "arbitrary" because train-mode BN couples the whole batch
            # through the shared statistics scratch.
            dimension_semantics=("arbitrary", "arbitrary"),
            vmem_limit_bytes=vmem_limit,
        ),
        cost_estimate=_cost_estimate(n_pad, in_f, h1, h2, h3, out_pad),
    )(x, w1, p1, w2, p2, w3, p3, w4, b4)
    return out[:n, :out_features]


def init_params(key, in_features=5, h1=256, h2=512, h3=256, out_features=10):
    keys = jax.random.split(key, 8)
    dims = [(in_features, h1), (h1, h2), (h2, h3), (h3, out_features)]
    params = []
    for i, (fi, fo) in enumerate(dims):
        # PyTorch: weight [out, in] xavier_uniform -> transpose to [in, out].
        limit = math.sqrt(6.0 / (fi + fo))
        w = jax.random.uniform(keys[2 * i], (fo, fi), jnp.float32, -limit, limit).T
        # nn.Linear default bias init: U(-1/sqrt(fan_in), 1/sqrt(fan_in)).
        bound = 1.0 / math.sqrt(fi)
        b = jax.random.uniform(keys[2 * i + 1], (fo,), jnp.float32, -bound, bound)
        w_bf16 = w.astype(jnp.bfloat16)   # bf16 weights: MXU-native, half DMA
        if i < 3:
            # Pack [bias; gamma=1; beta=0] into one [3, out] slab (single DMA).
            packed = jnp.stack(
                [b, jnp.ones((fo,), jnp.float32), jnp.zeros((fo,), jnp.float32)],
                axis=0)
            params += [w_bf16, packed]
        else:
            params += [w_bf16, b.reshape(1, fo)]
    return params


if __name__ == "__main__":
    key = jax.random.PRNGKey(0)
    k_x, k_p = jax.random.split(key)

    batch = 8
    in_features = 5
    x = jax.random.normal(k_x, (batch, in_features), jnp.float32)

    params = init_params(k_p, in_features=in_features,
                         h1=256, h2=512, h3=256, out_features=10)

    out = mlp_forward(x, params)
    out = jax.block_until_ready(out)
    assert out.shape == (batch, 10) and out.dtype == jnp.float32
    assert bool(jnp.all(jnp.isfinite(out)))
    print("KERNEL_OK")
</pallas_src>

<mosaic_0001>
module attributes {stable_mosaic.version = 11 : i64} {
  func.func @kernel(%arg0: i32, %arg1: i32, %arg2: memref<8x5xf32, #tpu.memory_space<vmem>>, %arg3: memref<5x256xbf16, #tpu.memory_space<vmem>>, %arg4: memref<3x256xf32, #tpu.memory_space<vmem>>, %arg5: memref<256x512xbf16, #tpu.memory_space<any>>, %arg6: memref<3x512xf32, #tpu.memory_space<vmem>>, %arg7: memref<512x256xbf16, #tpu.memory_space<any>>, %arg8: memref<3x256xf32, #tpu.memory_space<vmem>>, %arg9: memref<256x128xbf16, #tpu.memory_space<any>>, %arg10: memref<1x128xf32, #tpu.memory_space<vmem>>, %arg11: memref<8x128xf32, #tpu.memory_space<vmem>>, %arg12: memref<256x512xbf16, #tpu.memory_space<vmem>>, %arg13: memref<512x256xbf16, #tpu.memory_space<vmem>>, %arg14: memref<256x128xbf16, #tpu.memory_space<vmem>>, %arg15: memref<3x!tpu.dma_semaphore, #tpu.memory_space<semaphore_mem>>, %arg16: memref<8x256xf32, #tpu.memory_space<vmem>>, %arg17: memref<8x512xf32, #tpu.memory_space<vmem>>, %arg18: memref<8x256xf32, #tpu.memory_space<vmem>>, %arg19: memref<2x256xf32, #tpu.memory_space<vmem>>, %arg20: memref<2x512xf32, #tpu.memory_space<vmem>>, %arg21: memref<2x256xf32, #tpu.memory_space<vmem>>) attributes {dimension_semantics = [#tpu.dimension_semantics<arbitrary>, #tpu.dimension_semantics<arbitrary>], iteration_bounds = array<i64: 4, 1>, scalar_prefetch = 0 : i64, scratch_operands = 10 : i64, tpu.core_type = #tpu.core_type<tc>, window_params = [{transform_indices = @transform_0, window_bounds = array<i64: 8, 5>}, {pipeline_mode = #tpu.pipeline_mode<synchronous>, transform_indices = @transform_1, window_bounds = array<i64: 5, 256>}, {pipeline_mode = #tpu.pipeline_mode<synchronous>, transform_indices = @transform_2, window_bounds = array<i64: 3, 256>}, {}, {pipeline_mode = #tpu.pipeline_mode<synchronous>, transform_indices = @transform_4, window_bounds = array<i64: 3, 512>}, {}, {pipeline_mode = #tpu.pipeline_mode<synchronous>, transform_indices = @transform_6, window_bounds = array<i64: 3, 256>}, {}, {pipeline_mode = #tpu.pipeline_mode<synchronous>, transform_indices = @transform_8, window_bounds = array<i64: 1, 128>}, {transform_indices = @transform_9, window_bounds = array<i64: 8, 128>}]} {
    %c8_i32 = arith.constant 8 : i32
    %0 = arith.muli %arg1, %c8_i32 : i32
    %1 = tpu.assume_multiple %0, 8 : i32
    %c0_i32 = arith.constant 0 : i32
    %2 = arith.cmpi eq, %arg0, %c0_i32 : i32
    %c0_i32_0 = arith.constant 0 : i32
    %3 = arith.cmpi eq, %arg1, %c0_i32_0 : i32
    %4 = arith.andi %2, %3 : i1
    %5 = arith.extui %4 : i1 to i32
    %c0_i32_1 = arith.constant 0 : i32
    %6 = arith.cmpi ne, %5, %c0_i32_1 : i32
    scf.if %6 {
      %c0_i32_7 = arith.constant 0 : i32
      %19 = tpu.memref_slice %arg15[%c0_i32_7] : memref<3x!tpu.dma_semaphore, #tpu.memory_space<semaphore_mem>> -> memref<1x!tpu.dma_semaphore, #tpu.memory_space<semaphore_mem>>
      %20 = tpu.memref_squeeze %19 : memref<1x!tpu.dma_semaphore, #tpu.memory_space<semaphore_mem>> -> memref<!tpu.dma_semaphore, #tpu.memory_space<semaphore_mem>>
      tpu.enqueue_dma source(%arg5 : memref<256x512xbf16, #tpu.memory_space<any>>) target(%arg12 : memref<256x512xbf16, #tpu.memory_space<vmem>>) target_semaphore(%20 : memref<!tpu.dma_semaphore, #tpu.memory_space<semaphore_mem>>)
      %c1_i32_8 = arith.constant 1 : i32
      %21 = tpu.memref_slice %arg15[%c1_i32_8] : memref<3x!tpu.dma_semaphore, #tpu.memory_space<semaphore_mem>> -> memref<1x!tpu.dma_semaphore, #tpu.memory_space<semaphore_mem>>
      %22 = tpu.memref_squeeze %21 : memref<1x!tpu.dma_semaphore, #tpu.memory_space<semaphore_mem>> -> memref<!tpu.dma_semaphore, #tpu.memory_space<semaphore_mem>>
      tpu.enqueue_dma source(%arg7 : memref<512x256xbf16, #tpu.memory_space<any>>) target(%arg13 : memref<512x256xbf16, #tpu.memory_space<vmem>>) target_semaphore(%22 : memref<!tpu.dma_semaphore, #tpu.memory_space<semaphore_mem>>)
      %c2_i32_9 = arith.constant 2 : i32
      %23 = tpu.memref_slice %arg15[%c2_i32_9] : memref<3x!tpu.dma_semaphore, #tpu.memory_space<semaphore_mem>> -> memref<1x!tpu.dma_semaphore, #tpu.memory_space<semaphore_mem>>
      %24 = tpu.memref_squeeze %23 : memref<1x!tpu.dma_semaphore, #tpu.memory_space<semaphore_mem>> -> memref<!tpu.dma_semaphore, #tpu.memory_space<semaphore_mem>>
      tpu.enqueue_dma source(%arg9 : memref<256x128xbf16, #tpu.memory_space<any>>) target(%arg14 : memref<256x128xbf16, #tpu.memory_space<vmem>>) target_semaphore(%24 : memref<!tpu.dma_semaphore, #tpu.memory_space<semaphore_mem>>)
    } else {
    }
    %c0_i32_2 = arith.constant 0 : i32
    %7 = arith.cmpi eq, %arg0, %c0_i32_2 : i32
    %8 = arith.extui %7 : i1 to i32
    %c0_i32_3 = arith.constant 0 : i32
    %9 = arith.cmpi ne, %8, %c0_i32_3 : i32
    scf.if %9 {
      %c0 = arith.constant 0 : index
      %c0_7 = arith.constant 0 : index
      %19 = vector.load %arg2[%c0, %c0_7] : memref<8x5xf32, #tpu.memory_space<vmem>>, vector<8x5xf32>
      %20 = arith.truncf %19 : vector<8x5xf32> to vector<8x5xbf16>
      %c0_8 = arith.constant 0 : index
      %c0_9 = arith.constant 0 : index
      %21 = vector.load %arg3[%c0_8, %c0_9] : memref<5x256xbf16, #tpu.memory_space<vmem>>, vector<5x256xbf16>
      %cst = arith.constant dense<0.000000e+00> : vector<8x256xf32>
      %22 = tpu.matmul %20, %21, %cst {dimension_numbers = #tpu.dot_dimension_numbers<[1], [0], [0], [1], [0, 0, 1, 1], [], []>} : vector<8x5xbf16>, vector<5x256xbf16>, vector<8x256xf32> -> vector<8x256xf32>
      %c0_10 = arith.constant 0 : index
      %c0_11 = arith.constant 0 : index
      %23 = vector.load %arg4[%c0_10, %c0_11] : memref<3x256xf32, #tpu.memory_space<vmem>>, vector<1x256xf32>
      %24 = vector.broadcast %23 : vector<1x256xf32> to vector<8x256xf32>
      %25 = arith.addf %22, %24 : vector<8x256xf32>
      %cst_12 = arith.constant 0.000000e+00 : f32
      %26 = vector.broadcast %cst_12 : f32 to vector<8x256xf32>
      %27 = arith.maximumf %25, %26 : vector<8x256xf32>
      %28 = arith.index_cast %1 : i32 to index
      %c0_13 = arith.constant 0 : index
      %29 = vector.load %arg16[%28, %c0_13] : memref<8x256xf32, #tpu.memory_space<vmem>>, vector<8x256xf32>
      tpu.vector_store %arg16[%28, %c0_13], %27 {strides = array<i32>} : memref<8x256xf32, #tpu.memory_space<vmem>>, vector<8x256xf32>,
      %c0_i32_14 = arith.constant 0 : i32
      %30 = arith.cmpi eq, %arg1, %c0_i32_14 : i32
      %31 = arith.extui %30 : i1 to i32
      %c0_i32_15 = arith.constant 0 : i32
      %32 = arith.cmpi ne, %31, %c0_i32_15 : i32
      scf.if %32 {
        %cst_25 = arith.constant 0.000000e+00 : f32
        %44 = vector.broadcast %cst_25 : f32 to vector<2x256xf32>
        %c0_26 = arith.constant 0 : index
        %c0_27 = arith.constant 0 : index
        %45 = vector.load %arg19[%c0_26, %c0_27] : memref<2x256xf32, #tpu.memory_space<vmem>>, vector<2x256xf32>
        tpu.vector_store %arg19[%c0_26, %c0_27], %44 {strides = array<i32>} : memref<2x256xf32, #tpu.memory_space<vmem>>, vector<2x256xf32>,
      } else {
      }
      %c0_16 = arith.constant 0 : index
      %c0_17 = arith.constant 0 : index
      %33 = vector.load %arg19[%c0_16, %c0_17] : memref<2x256xf32, #tpu.memory_space<vmem>>, vector<1x256xf32>
      %cst_18 = arith.constant dense<0.000000e+00> : vector<256xf32>
      %34 = vector.multi_reduction <add>, %27, %cst_18 [0] : vector<8x256xf32> to vector<256xf32>
      %35 = vector.shape_cast %34 : vector<256xf32> to vector<1x256xf32>
      %36 = arith.addf %33, %35 : vector<1x256xf32>
      %c0_19 = arith.constant 0 : index
      %c0_20 = arith.constant 0 : index
      %37 = vector.load %arg19[%c0_19, %c0_20] : memref<2x256xf32, #tpu.memory_space<vmem>>, vector<1x256xf32>
      tpu.vector_store %arg19[%c0_19, %c0_20], %36 {strides = array<i32>} : memref<2x256xf32, #tpu.memory_space<vmem>>, vector<1x256xf32>,
      %c1 = arith.constant 1 : index
      %c0_21 = arith.constant 0 : index
      %38 = vector.load %arg19[%c1, %c0_21] : memref<2x256xf32, #tpu.memory_space<vmem>>, vector<1x256xf32>
      %39 = arith.mulf %27, %27 : vector<8x256xf32>
      %cst_22 = arith.constant dense<0.000000e+00> : vector<256xf32>
      %40 = vector.multi_reduction <add>, %39, %cst_22 [0] : vector<8x256xf32> to vector<256xf32>
      %41 = vector.shape_cast %40 : vector<256xf32> to vector<1x256xf32>
      %42 = arith.addf %38, %41 : vector<1x256xf32>
      %c1_23 = arith.constant 1 : index
      %c0_24 = arith.constant 0 : index
      %43 = vector.load %arg19[%c1_23, %c0_24] : memref<2x256xf32, #tpu.memory_space<vmem>>, vector<1x256xf32>
      tpu.vector_store %arg19[%c1_23, %c0_24], %42 {strides = array<i32>} : memref<2x256xf32, #tpu.memory_space<vmem>>, vector<1x256xf32>,
    } else {
    }
    %c1_i32 = arith.constant 1 : i32
    %10 = arith.cmpi eq, %arg0, %c1_i32 : i32
    %11 = arith.extui %10 : i1 to i32
    %c0_i32_4 = arith.constant 0 : i32
    %12 = arith.cmpi ne, %11, %c0_i32_4 : i32
    scf.if %12 {
      %c0_i32_7 = arith.constant 0 : i32
      %19 = arith.cmpi eq, %arg1, %c0_i32_7 : i32
      %20 = arith.extui %19 : i1 to i32
      %c0_i32_8 = arith.constant 0 : i32
      %21 = arith.cmpi ne, %20, %c0_i32_8 : i32
      scf.if %21 {
        %c0_i32_36 = arith.constant 0 : i32
        %68 = tpu.memref_slice %arg15[%c0_i32_36] : memref<3x!tpu.dma_semaphore, #tpu.memory_space<semaphore_mem>> -> memref<1x!tpu.dma_semaphore, #tpu.memory_space<semaphore_mem>>
        %69 = tpu.memref_squeeze %68 : memref<1x!tpu.dma_semaphore, #tpu.memory_space<semaphore_mem>> -> memref<!tpu.dma_semaphore, #tpu.memory_space<semaphore_mem>>
        tpu.wait_dma2 semaphore(%69 : memref<!tpu.dma_semaphore, #tpu.memory_space<semaphore_mem>>) src(%arg5 : memref<256x512xbf16, #tpu.memory_space<any>>) dst(%arg12 : memref<256x512xbf16, #tpu.memory_space<vmem>>)
      } else {
      }
      %c0 = arith.constant 0 : index
      %c0_9 = arith.constant 0 : index
      %22 = vector.load %arg19[%c0, %c0_9] : memref<2x256xf32, #tpu.memory_space<vmem>>, vector<1x256xf32>
      %cst = arith.constant 1.250000e-01 : f32
      %23 = vector.broadcast %cst : f32 to vector<1x256xf32>
      %24 = arith.mulf %22, %23 : vector<1x256xf32>
      %c1 = arith.constant 1 : index
      %c0_10 = arith.constant 0 : index
      %25 = vector.load %arg19[%c1, %c0_10] : memref<2x256xf32, #tpu.memory_space<vmem>>, vector<1x256xf32>
      %cst_11 = arith.constant 1.250000e-01 : f32
      %26 = vector.broadcast %cst_11 : f32 to vector<1x256xf32>
      %27 = arith.mulf %25, %26 : vector<1x256xf32>
      %28 = arith.mulf %24, %24 : vector<1x256xf32>
      %29 = arith.subf %27, %28 : vector<1x256xf32>
      %c1_12 = arith.constant 1 : index
      %c0_13 = arith.constant 0 : index
      %30 = vector.load %arg4[%c1_12, %c0_13] : memref<3x256xf32, #tpu.memory_space<vmem>>, vector<1x256xf32>
      %cst_14 = arith.constant 9.99999974E-6 : f32
      %31 = vector.broadcast %cst_14 : f32 to vector<1x256xf32>
      %32 = arith.addf %29, %31 : vector<1x256xf32>
      %33 = math.rsqrt %32 : vector<1x256xf32>
      %34 = arith.mulf %30, %33 : vector<1x256xf32>
      %c2 = arith.constant 2 : index
      %c0_15 = arith.constant 0 : index
      %35 = vector.load %arg4[%c2, %c0_15] : memref<3x256xf32, #tpu.memory_space<vmem>>, vector<1x256xf32>
      %36 = arith.mulf %24, %34 : vector<1x256xf32>
      %37 = arith.subf %35, %36 : vector<1x256xf32>
      %38 = arith.index_cast %1 : i32 to index
      %c0_16 = arith.constant 0 : index
      %39 = vector.load %arg16[%38, %c0_16] : memref<8x256xf32, #tpu.memory_space<vmem>>, vector<8x256xf32>
      %40 = vector.broadcast %34 : vector<1x256xf32> to vector<8x256xf32>
      %41 = arith.mulf %39, %40 : vector<8x256xf32>
      %42 = vector.broadcast %37 : vector<1x256xf32> to vector<8x256xf32>
      %43 = arith.addf %41, %42 : vector<8x256xf32>
      %44 = arith.truncf %43 : vector<8x256xf32> to vector<8x256xbf16>
      %c0_17 = arith.constant 0 : index
      %c0_18 = arith.constant 0 : index
      %45 = vector.load %arg12[%c0_17, %c0_18] : memref<256x512xbf16, #tpu.memory_space<vmem>>, vector<256x512xbf16>
      %cst_19 = arith.constant dense<0.000000e+00> : vector<8x512xf32>
      %46 = tpu.matmul %44, %45, %cst_19 {dimension_numbers = #tpu.dot_dimension_numbers<[1], [0], [0], [1], [0, 0, 1, 1], [], []>} : vector<8x256xbf16>, vector<256x512xbf16>, vector<8x512xf32> -> vector<8x512xf32>
      %c0_20 = arith.constant 0 : index
      %c0_21 = arith.constant 0 : index
      %47 = vector.load %arg6[%c0_20, %c0_21] : memref<3x512xf32, #tpu.memory_space<vmem>>, vector<1x512xf32>
      %48 = vector.broadcast %47 : vector<1x512xf32> to vector<8x512xf32>
      %49 = arith.addf %46, %48 : vector<8x512xf32>
      %cst_22 = arith.constant 0.000000e+00 : f32
      %50 = vector.broadcast %cst_22 : f32 to vector<8x512xf32>
      %51 = arith.maximumf %49, %50 : vector<8x512xf32>
      %52 = arith.index_cast %1 : i32 to index
      %c0_23 = arith.constant 0 : index
      %53 = vector.load %arg17[%52, %c0_23] : memref<8x512xf32, #tpu.memory_space<vmem>>, vector<8x512xf32>
      tpu.vector_store %arg17[%52, %c0_23], %51 {strides = array<i32>} : memref<8x512xf32, #tpu.memory_space<vmem>>, vector<8x512xf32>,
      %c0_i32_24 = arith.constant 0 : i32
      %54 = arith.cmpi eq, %arg1, %c0_i32_24 : i32
      %55 = arith.extui %54 : i1 to i32
      %c0_i32_25 = arith.constant 0 : i32
      %56 = arith.cmpi ne, %55, %c0_i32_25 : i32
      scf.if %56 {
        %cst_36 = arith.constant 0.000000e+00 : f32
        %68 = vector.broadcast %cst_36 : f32 to vector<2x512xf32>
        %c0_37 = arith.constant 0 : index
        %c0_38 = arith.constant 0 : index
        %69 = vector.load %arg20[%c0_37, %c0_38] : memref<2x512xf32, #tpu.memory_space<vmem>>, vector<2x512xf32>
        tpu.vector_store %arg20[%c0_37, %c0_38], %68 {strides = array<i32>} : memref<2x512xf32, #tpu.memory_space<vmem>>, vector<2x512xf32>,
      } else {
      }
      %c0_26 = arith.constant 0 : index
      %c0_27 = arith.constant 0 : index
      %57 = vector.load %arg20[%c0_26, %c0_27] : memref<2x512xf32, #tpu.memory_space<vmem>>, vector<1x512xf32>
      %cst_28 = arith.constant dense<0.000000e+00> : vector<512xf32>
      %58 = vector.multi_reduction <add>, %51, %cst_28 [0] : vector<8x512xf32> to vector<512xf32>
      %59 = vector.shape_cast %58 : vector<512xf32> to vector<1x512xf32>
      %60 = arith.addf %57, %59 : vector<1x512xf32>
      %c0_29 = arith.constant 0 : index
      %c0_30 = arith.constant 0 : index
      %61 = vector.load %arg20[%c0_29, %c0_30] : memref<2x512xf32, #tpu.memory_space<vmem>>, vector<1x512xf32>
      tpu.vector_store %arg20[%c0_29, %c0_30], %60 {strides = array<i32>} : memref<2x512xf32, #tpu.memory_space<vmem>>, vector<1x512xf32>,
      %c1_31 = arith.constant 1 : index
      %c0_32 = arith.constant 0 : index
      %62 = vector.load %arg20[%c1_31, %c0_32] : memref<2x512xf32, #tpu.memory_space<vmem>>, vector<1x512xf32>
      %63 = arith.mulf %51, %51 : vector<8x512xf32>
      %cst_33 = arith.constant dense<0.000000e+00> : vector<512xf32>
      %64 = vector.multi_reduction <add>, %63, %cst_33 [0] : vector<8x512xf32> to vector<512xf32>
      %65 = vector.shape_cast %64 : vector<512xf32> to vector<1x512xf32>
      %66 = arith.addf %62, %65 : vector<1x512xf32>
      %c1_34 = arith.constant 1 : index
      %c0_35 = arith.constant 0 : index
      %67 = vector.load %arg20[%c1_34, %c0_35] : memref<2x512xf32, #tpu.memory_space<vmem>>, vector<1x512xf32>
      tpu.vector_store %arg20[%c1_34, %c0_35], %66 {strides = array<i32>} : memref<2x512xf32, #tpu.memory_space<vmem>>, vector<1x512xf32>,
    } else {
    }
    %c2_i32 = arith.constant 2 : i32
    %13 = arith.cmpi eq, %arg0, %c2_i32 : i32
    %14 = arith.extui %13 : i1 to i32
    %c0_i32_5 = arith.constant 0 : i32
    %15 = arith.cmpi ne, %14, %c0_i32_5 : i32
    scf.if %15 {
      %c0_i32_7 = arith.constant 0 : i32
      %19 = arith.cmpi eq, %arg1, %c0_i32_7 : i32
      %20 = arith.extui %19 : i1 to i32
      %c0_i32_8 = arith.constant 0 : i32
      %21 = arith.cmpi ne, %20, %c0_i32_8 : i32
      scf.if %21 {
        %c1_i32_36 = arith.constant 1 : i32
        %68 = tpu.memref_slice %arg15[%c1_i32_36] : memref<3x!tpu.dma_semaphore, #tpu.memory_space<semaphore_mem>> -> memref<1x!tpu.dma_semaphore, #tpu.memory_space<semaphore_mem>>
        %69 = tpu.memref_squeeze %68 : memref<1x!tpu.dma_semaphore, #tpu.memory_space<semaphore_mem>> -> memref<!tpu.dma_semaphore, #tpu.memory_space<semaphore_mem>>
        tpu.wait_dma2 semaphore(%69 : memref<!tpu.dma_semaphore, #tpu.memory_space<semaphore_mem>>) src(%arg7 : memref<512x256xbf16, #tpu.memory_space<any>>) dst(%arg13 : memref<512x256xbf16, #tpu.memory_space<vmem>>)
      } else {
      }
      %c0 = arith.constant 0 : index
      %c0_9 = arith.constant 0 : index
      %22 = vector.load %arg20[%c0, %c0_9] : memref<2x512xf32, #tpu.memory_space<vmem>>, vector<1x512xf32>
      %cst = arith.constant 1.250000e-01 : f32
      %23 = vector.broadcast %cst : f32 to vector<1x512xf32>
      %24 = arith.mulf %22, %23 : vector<1x512xf32>
      %c1 = arith.constant 1 : index
      %c0_10 = arith.constant 0 : index
      %25 = vector.load %arg20[%c1, %c0_10] : memref<2x512xf32, #tpu.memory_space<vmem>>, vector<1x512xf32>
      %cst_11 = arith.constant 1.250000e-01 : f32
      %26 = vector.broadcast %cst_11 : f32 to vector<1x512xf32>
      %27 = arith.mulf %25, %26 : vector<1x512xf32>
      %28 = arith.mulf %24, %24 : vector<1x512xf32>
      %29 = arith.subf %27, %28 : vector<1x512xf32>
      %c1_12 = arith.constant 1 : index
      %c0_13 = arith.constant 0 : index
      %30 = vector.load %arg6[%c1_12, %c0_13] : memref<3x512xf32, #tpu.memory_space<vmem>>, vector<1x512xf32>
      %cst_14 = arith.constant 9.99999974E-6 : f32
      %31 = vector.broadcast %cst_14 : f32 to vector<1x512xf32>
      %32 = arith.addf %29, %31 : vector<1x512xf32>
      %33 = math.rsqrt %32 : vector<1x512xf32>
      %34 = arith.mulf %30, %33 : vector<1x512xf32>
      %c2 = arith.constant 2 : index
      %c0_15 = arith.constant 0 : index
      %35 = vector.load %arg6[%c2, %c0_15] : memref<3x512xf32, #tpu.memory_space<vmem>>, vector<1x512xf32>
      %36 = arith.mulf %24, %34 : vector<1x512xf32>
      %37 = arith.subf %35, %36 : vector<1x512xf32>
      %38 = arith.index_cast %1 : i32 to index
      %c0_16 = arith.constant 0 : index
      %39 = vector.load %arg17[%38, %c0_16] : memref<8x512xf32, #tpu.memory_space<vmem>>, vector<8x512xf32>
      %40 = vector.broadcast %34 : vector<1x512xf32> to vector<8x512xf32>
      %41 = arith.mulf %39, %40 : vector<8x512xf32>
      %42 = vector.broadcast %37 : vector<1x512xf32> to vector<8x512xf32>
      %43 = arith.addf %41, %42 : vector<8x512xf32>
      %44 = arith.truncf %43 : vector<8x512xf32> to vector<8x512xbf16>
      %c0_17 = arith.constant 0 : index
      %c0_18 = arith.constant 0 : index
      %45 = vector.load %arg13[%c0_17, %c0_18] : memref<512x256xbf16, #tpu.memory_space<vmem>>, vector<512x256xbf16>
      %cst_19 = arith.constant dense<0.000000e+00> : vector<8x256xf32>
      %46 = tpu.matmul %44, %45, %cst_19 {dimension_numbers = #tpu.dot_dimension_numbers<[1], [0], [0], [1], [0, 0, 1, 1], [], []>} : vector<8x512xbf16>, vector<512x256xbf16>, vector<8x256xf32> -> vector<8x256xf32>
      %c0_20 = arith.constant 0 : index
      %c0_21 = arith.constant 0 : index
      %47 = vector.load %arg8[%c0_20, %c0_21] : memref<3x256xf32, #tpu.memory_space<vmem>>, vector<1x256xf32>
      %48 = vector.broadcast %47 : vector<1x256xf32> to vector<8x256xf32>
      %49 = arith.addf %46, %48 : vector<8x256xf32>
      %cst_22 = arith.constant 0.000000e+00 : f32
      %50 = vector.broadcast %cst_22 : f32 to vector<8x256xf32>
      %51 = arith.maximumf %49, %50 : vector<8x256xf32>
      %52 = arith.index_cast %1 : i32 to index
      %c0_23 = arith.constant 0 : index
      %53 = vector.load %arg18[%52, %c0_23] : memref<8x256xf32, #tpu.memory_space<vmem>>, vector<8x256xf32>
      tpu.vector_store %arg18[%52, %c0_23], %51 {strides = array<i32>} : memref<8x256xf32, #tpu.memory_space<vmem>>, vector<8x256xf32>,
      %c0_i32_24 = arith.constant 0 : i32
      %54 = arith.cmpi eq, %arg1, %c0_i32_24 : i32
      %55 = arith.extui %54 : i1 to i32
      %c0_i32_25 = arith.constant 0 : i32
      %56 = arith.cmpi ne, %55, %c0_i32_25 : i32
      scf.if %56 {
        %cst_36 = arith.constant 0.000000e+00 : f32
        %68 = vector.broadcast %cst_36 : f32 to vector<2x256xf32>
        %c0_37 = arith.constant 0 : index
        %c0_38 = arith.constant 0 : index
        %69 = vector.load %arg21[%c0_37, %c0_38] : memref<2x256xf32, #tpu.memory_space<vmem>>, vector<2x256xf32>
        tpu.vector_store %arg21[%c0_37, %c0_38], %68 {strides = array<i32>} : memref<2x256xf32, #tpu.memory_space<vmem>>, vector<2x256xf32>,
      } else {
      }
      %c0_26 = arith.constant 0 : index
      %c0_27 = arith.constant 0 : index
      %57 = vector.load %arg21[%c0_26, %c0_27] : memref<2x256xf32, #tpu.memory_space<vmem>>, vector<1x256xf32>
      %cst_28 = arith.constant dense<0.000000e+00> : vector<256xf32>
      %58 = vector.multi_reduction <add>, %51, %cst_28 [0] : vector<8x256xf32> to vector<256xf32>
      %59 = vector.shape_cast %58 : vector<256xf32> to vector<1x256xf32>
      %60 = arith.addf %57, %59 : vector<1x256xf32>
      %c0_29 = arith.constant 0 : index
      %c0_30 = arith.constant 0 : index
      %61 = vector.load %arg21[%c0_29, %c0_30] : memref<2x256xf32, #tpu.memory_space<vmem>>, vector<1x256xf32>
      tpu.vector_store %arg21[%c0_29, %c0_30], %60 {strides = array<i32>} : memref<2x256xf32, #tpu.memory_space<vmem>>, vector<1x256xf32>,
      %c1_31 = arith.constant 1 : index
      %c0_32 = arith.constant 0 : index
      %62 = vector.load %arg21[%c1_31, %c0_32] : memref<2x256xf32, #tpu.memory_space<vmem>>, vector<1x256xf32>
      %63 = arith.mulf %51, %51 : vector<8x256xf32>
      %cst_33 = arith.constant dense<0.000000e+00> : vector<256xf32>
      %64 = vector.multi_reduction <add>, %63, %cst_33 [0] : vector<8x256xf32> to vector<256xf32>
      %65 = vector.shape_cast %64 : vector<256xf32> to vector<1x256xf32>
      %66 = arith.addf %62, %65 : vector<1x256xf32>
      %c1_34 = arith.constant 1 : index
      %c0_35 = arith.constant 0 : index
      %67 = vector.load %arg21[%c1_34, %c0_35] : memref<2x256xf32, #tpu.memory_space<vmem>>, vector<1x256xf32>
      tpu.vector_store %arg21[%c1_34, %c0_35], %66 {strides = array<i32>} : memref<2x256xf32, #tpu.memory_space<vmem>>, vector<1x256xf32>,
    } else {
    }
    %c3_i32 = arith.constant 3 : i32
    %16 = arith.cmpi eq, %arg0, %c3_i32 : i32
    %17 = arith.extui %16 : i1 to i32
    %c0_i32_6 = arith.constant 0 : i32
    %18 = arith.cmpi ne, %17, %c0_i32_6 : i32
    scf.if %18 {
      %c0_i32_7 = arith.constant 0 : i32
      %19 = arith.cmpi eq, %arg1, %c0_i32_7 : i32
      %20 = arith.extui %19 : i1 to i32
      %c0_i32_8 = arith.constant 0 : i32
      %21 = arith.cmpi ne, %20, %c0_i32_8 : i32
      scf.if %21 {
        %c2_i32_24 = arith.constant 2 : i32
        %51 = tpu.memref_slice %arg15[%c2_i32_24] : memref<3x!tpu.dma_semaphore, #tpu.memory_space<semaphore_mem>> -> memref<1x!tpu.dma_semaphore, #tpu.memory_space<semaphore_mem>>
        %52 = tpu.memref_squeeze %51 : memref<1x!tpu.dma_semaphore, #tpu.memory_space<semaphore_mem>> -> memref<!tpu.dma_semaphore, #tpu.memory_space<semaphore_mem>>
        tpu.wait_dma2 semaphore(%52 : memref<!tpu.dma_semaphore, #tpu.memory_space<semaphore_mem>>) src(%arg9 : memref<256x128xbf16, #tpu.memory_space<any>>) dst(%arg14 : memref<256x128xbf16, #tpu.memory_space<vmem>>)
      } else {
      }
      %c0 = arith.constant 0 : index
      %c0_9 = arith.constant 0 : index
      %22 = vector.load %arg21[%c0, %c0_9] : memref<2x256xf32, #tpu.memory_space<vmem>>, vector<1x256xf32>
      %cst = arith.constant 1.250000e-01 : f32
      %23 = vector.broadcast %cst : f32 to vector<1x256xf32>
      %24 = arith.mulf %22, %23 : vector<1x256xf32>
      %c1 = arith.constant 1 : index
      %c0_10 = arith.constant 0 : index
      %25 = vector.load %arg21[%c1, %c0_10] : memref<2x256xf32, #tpu.memory_space<vmem>>, vector<1x256xf32>
      %cst_11 = arith.constant 1.250000e-01 : f32
      %26 = vector.broadcast %cst_11 : f32 to vector<1x256xf32>
      %27 = arith.mulf %25, %26 : vector<1x256xf32>
      %28 = arith.mulf %24, %24 : vector<1x256xf32>
      %29 = arith.subf %27, %28 : vector<1x256xf32>
      %c1_12 = arith.constant 1 : index
      %c0_13 = arith.constant 0 : index
      %30 = vector.load %arg8[%c1_12, %c0_13] : memref<3x256xf32, #tpu.memory_space<vmem>>, vector<1x256xf32>
      %cst_14 = arith.constant 9.99999974E-6 : f32
      %31 = vector.broadcast %cst_14 : f32 to vector<1x256xf32>
      %32 = arith.addf %29, %31 : vector<1x256xf32>
      %33 = math.rsqrt %32 : vector<1x256xf32>
      %34 = arith.mulf %30, %33 : vector<1x256xf32>
      %c2 = arith.constant 2 : index
      %c0_15 = arith.constant 0 : index
      %35 = vector.load %arg8[%c2, %c0_15] : memref<3x256xf32, #tpu.memory_space<vmem>>, vector<1x256xf32>
      %36 = arith.mulf %24, %34 : vector<1x256xf32>
      %37 = arith.subf %35, %36 : vector<1x256xf32>
      %38 = arith.index_cast %1 : i32 to index
      %c0_16 = arith.constant 0 : index
      %39 = vector.load %arg18[%38, %c0_16] : memref<8x256xf32, #tpu.memory_space<vmem>>, vector<8x256xf32>
      %40 = vector.broadcast %34 : vector<1x256xf32> to vector<8x256xf32>
      %41 = arith.mulf %39, %40 : vector<8x256xf32>
      %42 = vector.broadcast %37 : vector<1x256xf32> to vector<8x256xf32>
      %43 = arith.addf %41, %42 : vector<8x256xf32>
      %44 = arith.truncf %43 : vector<8x256xf32> to vector<8x256xbf16>
      %c0_17 = arith.constant 0 : index
      %c0_18 = arith.constant 0 : index
      %45 = vector.load %arg14[%c0_17, %c0_18] : memref<256x128xbf16, #tpu.memory_space<vmem>>, vector<256x128xbf16>
      %cst_19 = arith.constant dense<0.000000e+00> : vector<8x128xf32>
      %46 = tpu.matmul %44, %45, %cst_19 {dimension_numbers = #tpu.dot_dimension_numbers<[1], [0], [0], [1], [0, 0, 1, 1], [], []>} : vector<8x256xbf16>, vector<256x128xbf16>, vector<8x128xf32> -> vector<8x128xf32>
      %c0_20 = arith.constant 0 : index
      %c0_21 = arith.constant 0 : index
      %47 = vector.load %arg10[%c0_20, %c0_21] : memref<1x128xf32, #tpu.memory_space<vmem>>, vector<1x128xf32>
      %48 = vector.broadcast %47 : vector<1x128xf32> to vector<8x128xf32>
      %49 = arith.addf %46, %48 : vector<8x128xf32>
      %c0_22 = arith.constant 0 : index
      %c0_23 = arith.constant 0 : index
      %50 = vector.load %arg11[%c0_22, %c0_23] : memref<8x128xf32, #tpu.memory_space<vmem>>, vector<8x128xf32>
      tpu.vector_store %arg11[%c0_22, %c0_23], %49 {strides = array<i32>} : memref<8x128xf32, #tpu.memory_space<vmem>>, vector<8x128xf32>,
    } else {
    }
    return
  }
  func.func @transform_0(%arg0: i32, %arg1: i32) -> (i32, i32) {
    %c0_i32 = arith.constant 0 : i32
    %c0_i32_0 = arith.constant 0 : i32
    return %arg1, %c0_i32 : i32, i32
  }
  func.func @transform_1(%arg0: i32, %arg1: i32) -> (i32, i32) {
    %c0_i32 = arith.constant 0 : i32
    %c0_i32_0 = arith.constant 0 : i32
    %c0_i32_1 = arith.constant 0 : i32
    return %c0_i32, %c0_i32_0 : i32, i32
  }
  func.func @transform_2(%arg0: i32, %arg1: i32) -> (i32, i32) {
    %c0_i32 = arith.constant 0 : i32
    %c0_i32_0 = arith.constant 0 : i32
    %c0_i32_1 = arith.constant 0 : i32
    return %c0_i32, %c0_i32_0 : i32, i32
  }
  func.func @transform_4(%arg0: i32, %arg1: i32) -> (i32, i32) {
    %c0_i32 = arith.constant 0 : i32
    %c0_i32_0 = arith.constant 0 : i32
    %c0_i32_1 = arith.constant 0 : i32
    return %c0_i32, %c0_i32_0 : i32, i32
  }
  func.func @transform_6(%arg0: i32, %arg1: i32) -> (i32, i32) {
    %c0_i32 = arith.constant 0 : i32
    %c0_i32_0 = arith.constant 0 : i32
    %c0_i32_1 = arith.constant 0 : i32
    return %c0_i32, %c0_i32_0 : i32, i32
  }
  func.func @transform_8(%arg0: i32, %arg1: i32) -> (i32, i32) {
    %c0_i32 = arith.constant 0 : i32
    %c0_i32_0 = arith.constant 0 : i32
    %c0_i32_1 = arith.constant 0 : i32
    return %c0_i32, %c0_i32_0 : i32, i32
  }
  func.func @transform_9(%arg0: i32, %arg1: i32) -> (i32, i32) {
    %c0_i32 = arith.constant 0 : i32
    %c0_i32_0 = arith.constant 0 : i32
    return %arg1, %c0_i32 : i32, i32
  }
}

</mosaic_0001>

<llo_original>
// kernel: tpu_custom_call.1
$region0: #{tpu_custom_call.1}
  #allocation0 [shape = 'u32[]', space=smem, size = 0x4, offset = 0x4, fixed_abs, tag = 'smem constant byte address 0x4 - core index']
  #allocation1 [shape = 'u32[72,128]{1,0:T(1,128)}', space=vmem, size = 0x9000, scoped, tag = 'internal scratch']
  #allocation2 [shape = 'bf16[256,512]{1,0:T(8,128)(2,1)}', space=vmem, size = 0x40000, scoped, tag = 'scratch operand']
  #allocation3 [shape = 'bf16[512,256]{1,0:T(8,128)(2,1)}', space=vmem, size = 0x40000, scoped, tag = 'scratch operand']
  #allocation4 [shape = 'bf16[256,128]{1,0:T(8,128)(2,1)}', space=vmem, size = 0x10000, scoped, tag = 'scratch operand']
  #allocation5 [shape = 's32[3]{0}', space=sflag, size = 0xc, scoped, tag = 'scratch operand']
  #allocation6 [shape = 'f32[8,256]{1,0:T(8,128)}', space=vmem, size = 0x2000, scoped, tag = 'scratch operand']
  #allocation7 [shape = 'f32[8,512]{1,0:T(8,128)}', space=vmem, size = 0x4000, scoped, tag = 'scratch operand']
  #allocation8 [shape = 'f32[8,256]{1,0:T(8,128)}', space=vmem, size = 0x2000, scoped, tag = 'scratch operand']
  #allocation9 [shape = 'f32[2,256]{1,0:T(2,128)}', space=vmem, size = 0x800, scoped, tag = 'scratch operand']
  #allocation10 [shape = 'f32[2,512]{1,0:T(2,128)}', space=vmem, size = 0x1000, scoped, tag = 'scratch operand']
  #allocation11 [shape = 'f32[2,256]{1,0:T(2,128)}', space=vmem, size = 0x800, scoped, tag = 'scratch operand']
  #allocation22 [shape = 's32[]', space=sflag, size = 0x4, offset = 0, fixed_abs, tag = 'sflag constant byte address 0x0 - dummy sync flag']
  #allocation23 [shape = 's32[]', space=sflag, size = 0x4, offset = 0, fixed_abs, tag = 'sflag constant byte address 0x0 - dummy sync flag']
  #allocation24 [shape = 'u32[]', space=smem, size = 0x4, offset = 0x44, fixed_abs, tag = 'smem constant byte address 0x44 - assertion arg 0']
  #allocation25 [shape = 'u32[]', space=smem, size = 0x4, offset = 0x48, fixed_abs, tag = 'smem constant byte address 0x48 - assertion arg 1']
  #allocation26 [shape = 's32[]', space=sflag, size = 0x4, offset = 0, fixed_abs, tag = 'sflag constant byte address 0x0 - dummy sync flag']
  #allocation27 [shape = 's32[]', space=sflag, size = 0x4, offset = 0, fixed_abs, tag = 'sflag constant byte address 0x0 - dummy sync flag']
  #allocation28 [shape = 's32[]', space=sflag, size = 0x4, offset = 0, fixed_abs, tag = 'sflag constant byte address 0x0 - dummy sync flag']
  #allocation29 [shape = 's32[]', space=sflag, size = 0x4, offset = 0, fixed_abs, tag = 'sflag constant byte address 0x0 - dummy sync flag']
  %s0 = inlined_call_operand.hbm [shape: f32[8,5], index: 0, kind: input, shape index: {}]
  %s1 = inlined_call_operand.hbm [shape: bf16[5,256], index: 1, kind: input, shape index: {}]
  %s2 = inlined_call_operand.hbm [shape: f32[3,256], index: 2, kind: input, shape index: {}]
  %s3 = inlined_call_operand.hbm [shape: bf16[256,512], index: 3, kind: input, shape index: {}]
  %s4 = inlined_call_operand.hbm [shape: f32[3,512], index: 4, kind: input, shape index: {}]
  %s5 = inlined_call_operand.hbm [shape: bf16[512,256], index: 5, kind: input, shape index: {}]
  %s6 = inlined_call_operand.hbm [shape: f32[3,256], index: 6, kind: input, shape index: {}]
  %s7 = inlined_call_operand.hbm [shape: bf16[256,128], index: 7, kind: input, shape index: {}]
  %s8 = inlined_call_operand.vmem [shape: f32[1,128], index: 8, kind: input, shape index: {}]
  %s9 = inlined_call_operand.hbm [shape: f32[8,128], index: 9, kind: output, shape index: {}]
  %s10 = sld [smem:[#allocation0]]
  $region133: #{tpu_custom_call.1} parent=0
    _
  %s12 = ssub.s32 1, %s10
  %s13 = scalar_select 0, %s12, %s10
  $region1: #{tpu_custom_call.1} parent=0
    #allocation12 [shape = 'u8[4096]{0}', space=vmem, size = 0x1000, scoped, tag = 'input window, operand 0, single buffered']
    #allocation13 [shape = 's32[2]{0}', space=sflag, size = 0x8, scoped, tag = 'scoped memory for tpu_custom_call.1']
    #allocation14 [shape = 's32[2]{0}', space=sflag, size = 0x8, scoped, tag = 'scoped memory for tpu_custom_call.1']
    #allocation15 [shape = 'u8[4096]{0}', space=vmem, size = 0x1000, scoped, tag = 'input window, operand 1, single buffered']
    #allocation16 [shape = 's32[1]{0}', space=sflag, size = 0x4, scoped, tag = 'scoped memory for tpu_custom_call.1']
    #allocation17 [shape = 'u8[4096]{0}', space=vmem, size = 0x1000, scoped, tag = 'input window, operand 2, single buffered']
    #allocation18 [shape = 'u8[8192]{0}', space=vmem, size = 0x2000, scoped, tag = 'input window, operand 4, single buffered']
    #allocation19 [shape = 's32[1]{0}', space=sflag, size = 0x4, scoped, tag = 'scoped memory for tpu_custom_call.1']
    #allocation20 [shape = 'u8[4096]{0}', space=vmem, size = 0x1000, scoped, tag = 'input window, operand 6, single buffered']
    #allocation21 [shape = 'u8[4096]{0}', space=vmem, size = 0x1000, scoped, tag = 'output window, operand 0, single buffered']
    %14 = vsyncpa [#allocation13], 0
    %15 = vsyncpa [#allocation16], 0
    %16 = vsyncpa [#allocation19], 0
    %17 = vsyncpa [#allocation14], 0
    loop: start=0, step=1, limit=6
    $region2: #{tpu_custom_call.1} parent=1 // loop_pre_header
      _
    $region3: #{tpu_custom_call.1} parent=1 // loop_header
      %s19 = sphi 0, %s23
      %p20 = scmp.ge.s32.totalorder %s19, 6
      %s26 = sphi 0, %s38
      %s27 = sphi 0, %s34
      %s28 = sphi 0, %s26
      %s29 = sphi 0, %s27
      %s30 = sphi 0, %s28
      %s31 = sphi 0, %s29
      %s41 = sphi 0, %s43
      %s44 = sphi 0, %s41
      %s45 = sphi 0, %s44
      %s61 = sphi 0, %s45
      %s65 = sphi 0, %s65
      %s67 = sphi 0, %s65
      %s68 = sphi 0, %s67
      %s82 = sphi 0, %s68
      %s86 = sphi 0, %s86
      %s88 = sphi 0, %s86
      %s89 = sphi 0, %s88
      %s103 = sphi 0, %s89
      %s107 = sphi 0, %s107
      %s109 = sphi 0, %s107
      %s110 = sphi 0, %s109
      %s124 = sphi 0, %s110
      %s128 = sphi 0, %s128
      %s130 = sphi 0, %s128
      %s131 = sphi 0, %s130
      %s145 = sphi 0, %s131
      %s149 = sphi 0, %s149
      %s151 = sphi 0, %s149
      %s152 = sphi 0, %s151
      %s166 = sphi 0, %s152
      %s172 = sphi 0, %s174
      %s175 = sphi 0, %s172
      %s176 = sphi 0, %s175
      %s192 = sphi 0, %s176
    $region4: #{tpu_custom_call.1} parent=1 // loop_header_branch
      %22 = sbr.rel (%p20) target = $region8
    $region5: #{tpu_custom_call.1} parent=1 // loop_body
      %s24 = ssub.s32 %s19, 1
      %s25 = ssub.s32 %s19, 2
      %s32 = sadd.s32 1, %s27
      %p33 = scmp.ge.s32.totalorder %s32, 1
      %s34 = scalar_select %p33, 0, %s32
      %s35 = sadd.s32 1, %s26
      %s36 = scalar_select %p33, %s35, %s26
      %p37 = scmp.ge.s32.totalorder %s36, 4
      %s38 = scalar_select %p37, 0, %s36
      %s39 = ssub.s32 %s27, %s34
      %p40 = scmp.eq.s32.totalorder %s39, 0
      %s42 = sadd.s32 %s41, 1
      %s43 = scalar_select %p40, %s41, %s42
      %p46 = pneg %p40
      %p47 = scmp.eq.s32.totalorder %s19, 3
      %p48 = por %p46, %p47
      %p49 = scmp.ne.s32.totalorder %s41, %s44
      %p50 = scmp.eq.s32.totalorder %s19, 0
      %p51 = por %p49, %p50
      %p52 = scmp.ne.s32.totalorder %s41, %s44
      %p53 = scmp.eq.s32.totalorder %s24, 3
      %p54 = por %p52, %p53
      %p55 = scmp.ne.s32.totalorder %s44, %s45
      %p56 = scmp.eq.s32.totalorder %s24, 0
      %p57 = por %p55, %p56
      %p58 = scmp.ne.s32.totalorder %s44, %s45
      %p59 = scmp.eq.s32.totalorder %s25, 3
      %p60 = por %p58, %p59
      %p62 = scmp.ne.s32.totalorder %s45, %s61
      %p63 = scmp.eq.s32.totalorder %s25, 0
      %p64 = por %p62, %p63
      %s66 = sadd.s32 %s65, 1
      %p69 = scmp.eq.s32.totalorder %s19, 3
      %p70 = scmp.ne.s32.totalorder %s65, %s67
      %p71 = scmp.eq.s32.totalorder %s19, 0
      %p72 = por %p70, %p71
      %p73 = scmp.ne.s32.totalorder %s65, %s67
      %p74 = scmp.eq.s32.totalorder %s24, 3
      %p75 = por %p73, %p74
      %p76 = scmp.ne.s32.totalorder %s67, %s68
      %p77 = scmp.eq.s32.totalorder %s24, 0
      %p78 = por %p76, %p77
      %p79 = scmp.ne.s32.totalorder %s67, %s68
      %p80 = scmp.eq.s32.totalorder %s25, 3
      %p81 = por %p79, %p80
      %p83 = scmp.ne.s32.totalorder %s68, %s82
      %p84 = scmp.eq.s32.totalorder %s25, 0
      %p85 = por %p83, %p84
      %s87 = sadd.s32 %s86, 1
      %p90 = scmp.eq.s32.totalorder %s19, 3
      %p91 = scmp.ne.s32.totalorder %s86, %s88
      %p92 = scmp.eq.s32.totalorder %s19, 0
      %p93 = por %p91, %p92
      %p94 = scmp.ne.s32.totalorder %s86, %s88
      %p95 = scmp.eq.s32.totalorder %s24, 3
      %p96 = por %p94, %p95
      %p97 = scmp.ne.s32.totalorder %s88, %s89
      %p98 = scmp.eq.s32.totalorder %s24, 0
      %p99 = por %p97, %p98
      %p100 = scmp.ne.s32.totalorder %s88, %s89
      %p101 = scmp.eq.s32.totalorder %s25, 3
      %p102 = por %p100, %p101
      %p104 = scmp.ne.s32.totalorder %s89, %s103
      %p105 = scmp.eq.s32.totalorder %s25, 0
      %p106 = por %p104, %p105
      %s108 = sadd.s32 %s107, 1
      %p111 = scmp.eq.s32.totalorder %s19, 3
      %p112 = scmp.ne.s32.totalorder %s107, %s109
      %p113 = scmp.eq.s32.totalorder %s19, 0
      %p114 = por %p112, %p113
      %p115 = scmp.ne.s32.totalorder %s107, %s109
      %p116 = scmp.eq.s32.totalorder %s24, 3
      %p117 = por %p115, %p116
      %p118 = scmp.ne.s32.totalorder %s109, %s110
      %p119 = scmp.eq.s32.totalorder %s24, 0
      %p120 = por %p118, %p119
      %p121 = scmp.ne.s32.totalorder %s109, %s110
      %p122 = scmp.eq.s32.totalorder %s25, 3
      %p123 = por %p121, %p122
      %p125 = scmp.ne.s32.totalorder %s110, %s124
      %p126 = scmp.eq.s32.totalorder %s25, 0
      %p127 = por %p125, %p126
      %s129 = sadd.s32 %s128, 1
      %p132 = scmp.eq.s32.totalorder %s19, 3
      %p133 = scmp.ne.s32.totalorder %s128, %s130
      %p134 = scmp.eq.s32.totalorder %s19, 0
      %p135 = por %p133, %p134
      %p136 = scmp.ne.s32.totalorder %s128, %s130
      %p137 = scmp.eq.s32.totalorder %s24, 3
      %p138 = por %p136, %p137
      %p139 = scmp.ne.s32.totalorder %s130, %s131
      %p140 = scmp.eq.s32.totalorder %s24, 0
      %p141 = por %p139, %p140
      %p142 = scmp.ne.s32.totalorder %s130, %s131
      %p143 = scmp.eq.s32.totalorder %s25, 3
      %p144 = por %p142, %p143
      %p146 = scmp.ne.s32.totalorder %s131, %s145
      %p147 = scmp.eq.s32.totalorder %s25, 0
      %p148 = por %p146, %p147
      %s150 = sadd.s32 %s149, 1
      %p153 = scmp.eq.s32.totalorder %s19, 3
      %p154 = scmp.ne.s32.totalorder %s149, %s151
      %p155 = scmp.eq.s32.totalorder %s19, 0
      %p156 = por %p154, %p155
      %p157 = scmp.ne.s32.totalorder %s149, %s151
      %p158 = scmp.eq.s32.totalorder %s24, 3
      %p159 = por %p157, %p158
      %p160 = scmp.ne.s32.totalorder %s151, %s152
      %p161 = scmp.eq.s32.totalorder %s24, 0
      %p162 = por %p160, %p161
      %p163 = scmp.ne.s32.totalorder %s151, %s152
      %p164 = scmp.eq.s32.totalorder %s25, 3
      %p165 = por %p163, %p164
      %p167 = scmp.ne.s32.totalorder %s152, %s166
      %p168 = scmp.eq.s32.totalorder %s25, 0
      %p169 = por %p167, %p168
      %s170 = ssub.s32 %s27, %s34
      %p171 = scmp.eq.s32.totalorder %s170, 0
      %s173 = sadd.s32 %s172, 1
      %s174 = scalar_select %p171, %s172, %s173
      %p177 = pneg %p171
      %p178 = scmp.eq.s32.totalorder %s19, 3
      %p179 = por %p177, %p178
      %p180 = scmp.ne.s32.totalorder %s172, %s175
      %p181 = scmp.eq.s32.totalorder %s19, 0
      %p182 = por %p180, %p181
      %p183 = scmp.ne.s32.totalorder %s172, %s175
      %p184 = scmp.eq.s32.totalorder %s24, 3
      %p185 = por %p183, %p184
      %p186 = scmp.ne.s32.totalorder %s175, %s176
      %p187 = scmp.eq.s32.totalorder %s24, 0
      %p188 = por %p186, %p187
      %p189 = scmp.ne.s32.totalorder %s175, %s176
      %p190 = scmp.eq.s32.totalorder %s25, 3
      %p191 = por %p189, %p190
      %p193 = scmp.ne.s32.totalorder %s176, %s192
      %p194 = scmp.eq.s32.totalorder %s25, 0
      %p195 = por %p193, %p194
      %p196 = scmp.le.s32.totalorder 1, %s19
      %p197 = scmp.lt.s32.totalorder %s19, 5
      %p198 = pnand %p196, %p197
      %p199 = pneg %p198
      // Predicated region
      $region9: #{tpu_custom_call.1} parent=5 // pred_check
        _
      $region10: #{tpu_custom_call.1} parent=5 // pred_check_branch
        %201 = sbr.rel (%p198) target = $region12
      $region11: #{tpu_custom_call.1} parent=5 // pred_region
        %s202 = ssub.s32 %s19, 1
        // Predicated region
        $region13: #{tpu_custom_call.1} parent=11 // pred_check
          %p203 = pneg %p57
        $region14: #{tpu_custom_call.1} parent=11 // pred_check_branch
          %205 = sbr.rel (%p203) target = $region16
        $region15: #{tpu_custom_call.1} parent=11 // pred_region
          %207 = vsyncadd [#allocation13], 0
          %s208 = smul.addr %s29, 8
          %s209 = scalar_lea.hbm %s0, %s208
          %s211 = sshll.u32 %s209, 4
          %s212 = int_to_ptr.hbm [resolvable:$true] %s211
          %s213 = sshll.u32 [#allocation12], 4
          %s214 = int_to_ptr.vmem [resolvable:$true] %s213
          %216 = dma.hbm_to_vmem [thread:$0]  %s212, 128, %s214, [#allocation13]
        $region16: #{tpu_custom_call.1} parent=11 // pred_fallthru
          _
        // Predicated region
        $region17: #{tpu_custom_call.1} parent=11 // pred_check
          %p217 = pneg %p78
        $region18: #{tpu_custom_call.1} parent=11 // pred_check_branch
          %219 = sbr.rel (%p217) target = $region20
        $region19: #{tpu_custom_call.1} parent=11 // pred_region
          %221 = vsyncadd [#allocation16], 0
          %s223 = sshll.u32 %s1, 4
          %s224 = int_to_ptr.hbm [resolvable:$true] %s223
          %s225 = sshll.u32 [#allocation15], 4
          %s226 = int_to_ptr.vmem [resolvable:$true] %s225
          %228 = dma.hbm_to_vmem [thread:$0]  %s224, 128, %s226, [#allocation16]
        $region20: #{tpu_custom_call.1} parent=11 // pred_fallthru
          _
        // Predicated region
        $region21: #{tpu_custom_call.1} parent=11 // pred_check
          %p229 = pneg %p99
        $region22: #{tpu_custom_call.1} parent=11 // pred_check_branch
          %231 = sbr.rel (%p229) target = $region24
        $region23: #{tpu_custom_call.1} parent=11 // pred_region
          %233 = vsyncadd [#allocation16], 0
          %s235 = sshll.u32 %s2, 4
          %s236 = int_to_ptr.hbm [resolvable:$true] %s235
          %s237 = sshll.u32 [#allocation17], 4
          %s238 = int_to_ptr.vmem [resolvable:$true] %s237
          %240 = dma.hbm_to_vmem [thread:$0]  %s236, 128, %s238, [#allocation16]
        $region24: #{tpu_custom_call.1} parent=11 // pred_fallthru
          _
        // Predicated region
        $region25: #{tpu_custom_call.1} parent=11 // pred_check
          %p241 = pneg %p120
        $region26: #{tpu_custom_call.1} parent=11 // pred_check_branch
          %243 = sbr.rel (%p241) target = $region28
        $region27: #{tpu_custom_call.1} parent=11 // pred_region
          %245 = vsyncadd [#allocation19], 0
          %s247 = sshll.u32 %s4, 4
          %s248 = int_to_ptr.hbm [resolvable:$true] %s247
          %s249 = sshll.u32 [#allocation18], 4
          %s250 = int_to_ptr.vmem [resolvable:$true] %s249
          %252 = dma.hbm_to_vmem [thread:$0]  %s248, 256, %s250, [#allocation19]
        $region28: #{tpu_custom_call.1} parent=11 // pred_fallthru
          _
        // Predicated region
        $region29: #{tpu_custom_call.1} parent=11 // pred_check
          %p253 = pneg %p141
        $region30: #{tpu_custom_call.1} parent=11 // pred_check_branch
          %255 = sbr.rel (%p253) target = $region32
        $region31: #{tpu_custom_call.1} parent=11 // pred_region
          %257 = vsyncadd [#allocation19], 0
          %s259 = sshll.u32 %s6, 4
          %s260 = int_to_ptr.hbm [resolvable:$true] %s259
          %s261 = sshll.u32 [#allocation20], 4
          %s262 = int_to_ptr.vmem [resolvable:$true] %s261
          %264 = dma.hbm_to_vmem [thread:$0]  %s260, 128, %s262, [#allocation19]
        $region32: #{tpu_custom_call.1} parent=11 // pred_fallthru
          _
        // Predicated region
        $region33: #{tpu_custom_call.1} parent=11 // pred_check
          %p265 = pneg %p162
        $region34: #{tpu_custom_call.1} parent=11 // pred_check_branch
          %267 = sbr.rel (%p265) target = $region36
        $region35: #{tpu_custom_call.1} parent=11 // pred_region
          _
        $region36: #{tpu_custom_call.1} parent=11 // pred_fallthru
          _
      $region12: #{tpu_custom_call.1} parent=5 // pred_fallthru
        _
      %p268 = scmp.lt.s32.totalorder %s19, 4
      // Predicated region
      $region37: #{tpu_custom_call.1} parent=5 // pred_check
        %p269 = pneg %p268
      $region38: #{tpu_custom_call.1} parent=5 // pred_check_branch
        %271 = sbr.rel (%p269) target = $region40
      $region39: #{tpu_custom_call.1} parent=5 // pred_region
        _
      $region40: #{tpu_custom_call.1} parent=5 // pred_fallthru
        _
      %p272 = scmp.le.s32.totalorder 1, %s19
      %p273 = scmp.lt.s32.totalorder %s19, 5
      %p274 = pnand %p272, %p273
      %p275 = pneg %p274
      // Predicated region
      $region41: #{tpu_custom_call.1} parent=5 // pred_check
        _
      $region42: #{tpu_custom_call.1} parent=5 // pred_check_branch
        %277 = sbr.rel (%p274) target = $region44
      $region43: #{tpu_custom_call.1} parent=5 // pred_region
        %s278 = ssub.s32 %s19, 1
        // Predicated region
        $region45: #{tpu_custom_call.1} parent=43 // pred_check
          %p279 = pneg %p57
        $region46: #{tpu_custom_call.1} parent=43 // pred_check_branch
          %281 = sbr.rel (%p279) target = $region48
        $region47: #{tpu_custom_call.1} parent=43 // pred_region
          %283 = dma.done [#allocation13], 128
        $region48: #{tpu_custom_call.1} parent=43 // pred_fallthru
          _
        // Predicated region
        $region49: #{tpu_custom_call.1} parent=43 // pred_check
          %p284 = pneg %p78
        $region50: #{tpu_custom_call.1} parent=43 // pred_check_branch
          %286 = sbr.rel (%p284) target = $region52
        $region51: #{tpu_custom_call.1} parent=43 // pred_region
          %288 = dma.done [#allocation16], 128
        $region52: #{tpu_custom_call.1} parent=43 // pred_fallthru
          _
        // Predicated region
        $region53: #{tpu_custom_call.1} parent=43 // pred_check
          %p289 = pneg %p99
        $region54: #{tpu_custom_call.1} parent=43 // pred_check_branch
          %291 = sbr.rel (%p289) target = $region56
        $region55: #{tpu_custom_call.1} parent=43 // pred_region
          %293 = dma.done [#allocation16], 128
        $region56: #{tpu_custom_call.1} parent=43 // pred_fallthru
          _
        // Predicated region
        $region57: #{tpu_custom_call.1} parent=43 // pred_check
          %p294 = pneg %p120
        $region58: #{tpu_custom_call.1} parent=43 // pred_check_branch
          %296 = sbr.rel (%p294) target = $region60
        $region59: #{tpu_custom_call.1} parent=43 // pred_region
          %298 = dma.done [#allocation19], 256
        $region60: #{tpu_custom_call.1} parent=43 // pred_fallthru
          _
        // Predicated region
        $region61: #{tpu_custom_call.1} parent=43 // pred_check
          %p299 = pneg %p141
        $region62: #{tpu_custom_call.1} parent=43 // pred_check_branch
          %301 = sbr.rel (%p299) target = $region64
        $region63: #{tpu_custom_call.1} parent=43 // pred_region
          %303 = dma.done [#allocation19], 128
        $region64: #{tpu_custom_call.1} parent=43 // pred_fallthru
          _
        %p304 = pneg %p57
        %p305 = pneg %p54
        %p306 = pneg %p78
        %p307 = pneg %p75
        %p308 = pneg %p99
        %p309 = pneg %p96
        %p310 = pneg %p120
        %p311 = pneg %p117
        %p312 = pneg %p141
        %p313 = pneg %p138
        %p314 = pneg %p162
        %p315 = pneg %p159
        %p316 = pneg %p188
        %p317 = pneg %p185
        %s319 = smul.u32 %s29, 8
        %p320 = scmp.eq.s32.totalorder %s28, 0
        %p321 = scmp.eq.s32.totalorder %s29, 0
        %p322 = pnand %p320, %p321
        %p323 = pneg %p322
        // Predicated region
        $region65: #{tpu_custom_call.1} parent=43 // pred_check
          _
        $region66: #{tpu_custom_call.1} parent=43 // pred_check_branch
          %325 = sbr.rel (%p322) target = $region68
        $region67: #{tpu_custom_call.1} parent=43 // pred_region
          // Predicated region
          $region69: #{tpu_custom_call.1} parent=67 // pred_check
            _
          $region70: #{tpu_custom_call.1} parent=67 // pred_check_branch
            %327 = sbr.rel target = $region72
          $region71: #{tpu_custom_call.1} parent=67 // pred_region
            %328 = sst [smem:[#allocation24]] [#allocation23]
            %329 = sst [smem:[#allocation25]] [#allocation22]
          $region72: #{tpu_custom_call.1} parent=67 // pred_fallthru
            _
          %331 = shalt.err (0)
          %s333 = sshll.u32 %s3, 4
          %s334 = int_to_ptr.hbm [resolvable:$true] %s333
          %s335 = sshll.u32 [#allocation2], 4
          %s336 = int_to_ptr.vmem [resolvable:$true] %s335
          %338 = dma.hbm_to_vmem [thread:$0]  %s334, 8192, %s336, [#allocation5]
          %s339 = scalar_lea.sflag [#allocation5], 1
          // Predicated region
          $region73: #{tpu_custom_call.1} parent=67 // pred_check
            _
          $region74: #{tpu_custom_call.1} parent=67 // pred_check_branch
            %341 = sbr.rel target = $region76
          $region75: #{tpu_custom_call.1} parent=67 // pred_region
            %342 = sst [smem:[#allocation24]] [#allocation27]
            %343 = sst [smem:[#allocation25]] [#allocation26]
          $region76: #{tpu_custom_call.1} parent=67 // pred_fallthru
            _
          %345 = shalt.err (0)
          %s347 = sshll.u32 %s5, 4
          %s348 = int_to_ptr.hbm [resolvable:$true] %s347
          %s349 = sshll.u32 [#allocation3], 4
          %s350 = int_to_ptr.vmem [resolvable:$true] %s349
          %352 = dma.hbm_to_vmem [thread:$0]  %s348, 8192, %s350, %s339
          %s353 = scalar_lea.sflag [#allocation5], 2
          // Predicated region
          $region77: #{tpu_custom_call.1} parent=67 // pred_check
            _
          $region78: #{tpu_custom_call.1} parent=67 // pred_check_branch
            %355 = sbr.rel target = $region80
          $region79: #{tpu_custom_call.1} parent=67 // pred_region
            %356 = sst [smem:[#allocation24]] [#allocation29]
            %357 = sst [smem:[#allocation25]] [#allocation28]
          $region80: #{tpu_custom_call.1} parent=67 // pred_fallthru
            _
          %359 = shalt.err (0)
          %s361 = sshll.u32 %s7, 4
          %s362 = int_to_ptr.hbm [resolvable:$true] %s361
          %s363 = sshll.u32 [#allocation4], 4
          %s364 = int_to_ptr.vmem [resolvable:$true] %s363
          %366 = dma.hbm_to_vmem [thread:$0]  %s362, 2048, %s364, %s353
        $region68: #{tpu_custom_call.1} parent=43 // pred_fallthru
          _
        // Predicated region
        $region81: #{tpu_custom_call.1} parent=43 // pred_check
          %p367 = pneg %p320
        $region82: #{tpu_custom_call.1} parent=43 // pred_check_branch
          %369 = sbr.rel (%p367) target = $region84
        $region83: #{tpu_custom_call.1} parent=43 // pred_region
          %v370 = vld [vmem:[#allocation12] sm:$0xff]
          %v371 = vpack.c.bf16 %v370, %v370
          %v372 = vld [vmem:[#allocation15] sm:$0x77]
          %v373 = vld [vmem:[#allocation17] ss:$4 sm:$0x3]
          %v375 = vperm.slane %v373, 0
          %v376 = vperm.slane %v373, 1
          %v380 = vunpack.c.l.b16 %v372
          %v381 = vunpack.c.h.b16 %v372
          %v382 = vpack.c.b16 %v380, %v380
          %v383 = vpack.c.b16 %v381, %v381
          %vm384 = vcmask 39936
          %v386 = vsel %vm384, %v371, 0
          %vm388 = vcmask 1041408
          %vm389 = vcmask 1042432
          %v390 = vsel %vm388, 4294967295, 65535
          %v391 = vsel %vm389, %v390, 0
          %v393 = vand.u32 %v382, %v391
          %v396 = vand.u32 %v383, %v391
          %398 = vmatpush.bf16.msra.mxu0 0
          %399 = vmatpush.bf16.msra.mxu0 0
          %400 = vmatpush.bf16.msra.mxu0 0
          %401 = vmatpush.bf16.msra.mxu0 0
          %402 = vmatpush.bf16.msra.mxu0 0
          %403 = vmatpush.bf16.msra.mxu0 0
          %404 = vmatpush.bf16.msra.mxu0 0
          %405 = vmatpush.bf16.msra.mxu0 %v393
          %406 = vmatmul.bf16.gmra.mxu0 %v386
          %v407 = vpop.f32.mrf.mxu0
          %v408 = vadd.f32 %v375, %v407
          %v409 = vpop.f32.mrf.mxu0
          %410 = vdwg.mxu0
          %411 = vmatpush.bf16.msra.mxu0 0
          %412 = vmatpush.bf16.msra.mxu0 0
          %413 = vmatpush.bf16.msra.mxu0 0
          %414 = vmatpush.bf16.msra.mxu0 0
          %415 = vmatpush.bf16.msra.mxu0 0
          %416 = vmatpush.bf16.msra.mxu0 0
          %417 = vmatpush.bf16.msra.mxu0 0
          %418 = vmatpush.bf16.msra.mxu0 %v396
          %419 = vmatmul.bf16.gmra.mxu0 %v386
          %v420 = vpop.f32.mrf.mxu0
          %v421 = vadd.f32 %v376, %v420
          %v422 = vpop.f32.mrf.mxu0
          %423 = vdwg.mxu0
          %v424 = vmax.f32 %v408, 0.0
          %v425 = vmax.f32 %v421, 0.0
          %s426 = sshra.s32 %s319, 3
          %s427 = sand.u32 %s319, 7
          %s428 = smul.u32 %s426, 2
          %s429 = smul.addr %s428, 8
          %s430 = scalar_lea.vmem [#allocation6], %s429
          %431 = vst [vmem:[%s430] sm:$0xff] %v424
          %432 = vst [vmem:[%s430 + $0x8] sm:$0xff] %v425
          // Predicated region
          $region85: #{tpu_custom_call.1} parent=83 // pred_check
            %p433 = pneg %p321
          $region86: #{tpu_custom_call.1} parent=83 // pred_check_branch
            %435 = sbr.rel (%p433) target = $region88
          $region87: #{tpu_custom_call.1} parent=83 // pred_region
            %436 = vst [vmem:[#allocation9] sm:$0xf] 0.0
          $region88: #{tpu_custom_call.1} parent=83 // pred_fallthru
            _
          %v437 = vld [vmem:[#allocation9] ss:$2 sm:$0x3]
          %v438 = vrot.slane %v424, 4
          %v439 = vadd.f32 %v424, %v438
          %v440 = vrot.slane %v439, 2
          %v441 = vadd.f32 %v439, %v440
          %v442 = vrot.slane %v441, 1
          %v443 = vadd.f32 %v441, %v442
          %v444 = vrot.slane %v425, 4
          %v445 = vadd.f32 %v425, %v444
          %v446 = vrot.slane %v445, 2
          %v447 = vadd.f32 %v445, %v446
          %v448 = vrot.slane %v447, 1
          %v449 = vadd.f32 %v447, %v448
          %v452 = vrot.slane %v449, 7
          %vm453 = vcmask 1040384
          %v454 = vsel %vm453, %v443, %v452
          %v456 = vadd.f32 %v437, %v454
          %v457 = vlaneseq
          %vm458 = vcmp.ge.s32.totalorder %v457, 0
          %vm459 = vcmp.lt.s32.totalorder %v457, 256
          %vm460 = vmand %vm458, %vm459
          %461 = vst.msk [vmem:[#allocation9] ss:$2 sm:$0x3] %vm460, %v456
          %s462 = scalar_lea.vmem [#allocation9], 1
          %v463 = vld [vmem:[%s462] ss:$2 sm:$0x3]
          %v464 = vmul.f32 %v424, %v424
          %v465 = vmul.f32 %v425, %v425
          %v466 = vrot.slane %v464, 4
          %v467 = vadd.f32 %v464, %v466
          %v468 = vrot.slane %v467, 2
          %v469 = vadd.f32 %v467, %v468
          %v470 = vrot.slane %v469, 1
          %v471 = vadd.f32 %v469, %v470
          %v472 = vrot.slane %v465, 4
          %v473 = vadd.f32 %v465, %v472
          %v474 = vrot.slane %v473, 2
          %v475 = vadd.f32 %v473, %v474
          %v476 = vrot.slane %v475, 1
          %v477 = vadd.f32 %v475, %v476
          %v480 = vrot.slane %v477, 7
          %v481 = vsel %vm453, %v471, %v480
          %v483 = vadd.f32 %v463, %v481
          %484 = vst.msk [vmem:[%s462] ss:$2 sm:$0x3] %vm460, %v483
        $region84: #{tpu_custom_call.1} parent=43 // pred_fallthru
          _
        %p485 = scmp.eq.s32.totalorder %s28, 1
        // Predicated region
        $region89: #{tpu_custom_call.1} parent=43 // pred_check
          %p486 = pneg %p485
        $region90: #{tpu_custom_call.1} parent=43 // pred_check_branch
          %488 = sbr.rel (%p486) target = $region92
        $region91: #{tpu_custom_call.1} parent=43 // pred_region
          // Predicated region
          $region93: #{tpu_custom_call.1} parent=91 // pred_check
            %p489 = pneg %p321
          $region94: #{tpu_custom_call.1} parent=91 // pred_check_branch
            %491 = sbr.rel (%p489) target = $region96
          $region95: #{tpu_custom_call.1} parent=91 // pred_region
            %s492 = smul.u32 4, 32
            %s493 = smul.u32 %s492, 4
            %s494 = sshll.u32 %s493, 4
            %495 = dma.done [#allocation5], %s494
          $region96: #{tpu_custom_call.1} parent=91 // pred_fallthru
            _
          %v496 = vld [vmem:[#allocation9] ss:$2 sm:$0x3]
          %v497 = vmul.f32 %v496, 0.125
          %s498 = scalar_lea.vmem [#allocation9], 1
          %v499 = vld [vmem:[%s498] ss:$2 sm:$0x3]
          %v500 = vmul.f32 %v499, 0.125
          %v501 = vmul.f32 %v497, %v497
          %v502 = vsub.f32 %v500, %v501
          %s503 = scalar_lea.vmem [#allocation17], 1
          %v504 = vld [vmem:[%s503] ss:$4 sm:$0x3]
          %v505 = vadd.f32 %v502, 1e-05
          %v506 = vrsqrt.pop %v505
          %v507 = vmul.f32 %v506, %v505
          %v508 = vmul.f32 %v507, %v506
          %v509 = vmul.f32 0.5, %v508
          %v510 = vsub.f32 1.5, %v509
          %v511 = vmul.f32 %v506, %v510
          %vm512 = vweird.f32 %v505
          %vm513 = vweird.f32 %v506
          %vm514 = vmor %vm512, %vm513
          %v515 = vsel %vm514, %v506, %v511
          %v516 = vmul.f32 %v504, %v515
          %s517 = scalar_lea.vmem [#allocation17], 2
          %v518 = vld [vmem:[%s517] ss:$4 sm:$0x3]
          %v519 = vmul.f32 %v497, %v516
          %v520 = vsub.f32 %v518, %v519
          %s521 = sshra.s32 %s319, 3
          %s522 = sand.u32 %s319, 7
          %s523 = smul.u32 %s521, 2
          %s524 = smul.addr %s523, 8
          %s525 = scalar_lea.vmem [#allocation6], %s524
          %v526 = vld [vmem:[%s525] sm:$0xff]
          %v527 = vld [vmem:[%s525 + $0x8] sm:$0xff]
          %v529 = vperm.slane %v516, 0
          %v530 = vperm.slane %v516, 1
          %v533 = vmul.f32 %v526, %v529
          %v534 = vmul.f32 %v527, %v530
          %v536 = vperm.slane %v520, 0
          %v537 = vperm.slane %v520, 1
          %v540 = vadd.f32 %v533, %v536
          %v541 = vadd.f32 %v534, %v537
          %v542 = vpack.c.bf16 %v540, %v540
          %v543 = vpack.c.bf16 %v541, %v541
          %v544 = vld [vmem:[#allocation2] sm:$0xff]
          %v545 = vld [vmem:[#allocation2 + $0x8] sm:$0xff]
          %v546 = vld [vmem:[#allocation2 + $0x10] sm:$0xff]
          %v547 = vld [vmem:[#allocation2 + $0x18] sm:$0xff]
          %v548 = vld [vmem:[#allocation2 + $0x20] sm:$0xff]
          %v549 = vld [vmem:[#allocation2 + $0x28] sm:$0xff]
          %v550 = vld [vmem:[#allocation2 + $0x30] sm:$0xff]
          %v551 = vld [vmem:[#allocation2 + $0x38] sm:$0xff]
          %v552 = vld [vmem:[#allocation2 + $0x40] sm:$0xff]
          %v553 = vld [vmem:[#allocation2 + $0x48] sm:$0xff]
          %v554 = vld [vmem:[#allocation2 + $0x50] sm:$0xff]
          %v555 = vld [vmem:[#allocation2 + $0x58] sm:$0xff]
          %v556 = vld [vmem:[#allocation2 + $0x60] sm:$0xff]
          %v557 = vld [vmem:[#allocation2 + $0x68] sm:$0xff]
          %v558 = vld [vmem:[#allocation2 + $0x70] sm:$0xff]
          %v559 = vld [vmem:[#allocation2 + $0x78] sm:$0xff]
          %v560 = vld [vmem:[#allocation2 + $0x80] sm:$0xff]
          %v561 = vld [vmem:[#allocation2 + $0x88] sm:$0xff]
          %v562 = vld [vmem:[#allocation2 + $0x90] sm:$0xff]
          %v563 = vld [vmem:[#allocation2 + $0x98] sm:$0xff]
          %v564 = vld [vmem:[#allocation2 + $0xa0] sm:$0xff]
          %v565 = vld [vmem:[#allocation2 + $0xa8] sm:$0xff]
          %v566 = vld [vmem:[#allocation2 + $0xb0] sm:$0xff]
          %v567 = vld [vmem:[#allocation2 + $0xb8] sm:$0xff]
          %v568 = vld [vmem:[#allocation2 + $0xc0] sm:$0xff]
          %v569 = vld [vmem:[#allocation2 + $0xc8] sm:$0xff]
          %v570 = vld [vmem:[#allocation2 + $0xd0] sm:$0xff]
          %v571 = vld [vmem:[#allocation2 + $0xd8] sm:$0xff]
          %v572 = vld [vmem:[#allocation2 + $0xe0] sm:$0xff]
          %v573 = vld [vmem:[#allocation2 + $0xe8] sm:$0xff]
          %v574 = vld [vmem:[#allocation2 + $0xf0] sm:$0xff]
          %v575 = vld [vmem:[#allocation2 + $0xf8] sm:$0xff]
          %v576 = vld [vmem:[#allocation2 + $0x100] sm:$0xff]
          %v577 = vld [vmem:[#allocation2 + $0x108] sm:$0xff]
          %v578 = vld [vmem:[#allocation2 + $0x110] sm:$0xff]
          %v579 = vld [vmem:[#allocation2 + $0x118] sm:$0xff]
          %v580 = vld [vmem:[#allocation2 + $0x120] sm:$0xff]
          %v581 = vld [vmem:[#allocation2 + $0x128] sm:$0xff]
          %v582 = vld [vmem:[#allocation2 + $0x130] sm:$0xff]
          %v583 = vld [vmem:[#allocation2 + $0x138] sm:$0xff]
          %v584 = vld [vmem:[#allocation2 + $0x140] sm:$0xff]
          %v585 = vld [vmem:[#allocation2 + $0x148] sm:$0xff]
          %v586 = vld [vmem:[#allocation2 + $0x150] sm:$0xff]
          %v587 = vld [vmem:[#allocation2 + $0x158] sm:$0xff]
          %v588 = vld [vmem:[#allocation2 + $0x160] sm:$0xff]
          %v589 = vld [vmem:[#allocation2 + $0x168] sm:$0xff]
          %v590 = vld [vmem:[#allocation2 + $0x170] sm:$0xff]
          %v591 = vld [vmem:[#allocation2 + $0x178] sm:$0xff]
          %v592 = vld [vmem:[#allocation2 + $0x180] sm:$0xff]
          %v593 = vld [vmem:[#allocation2 + $0x188] sm:$0xff]
          %v594 = vld [vmem:[#allocation2 + $0x190] sm:$0xff]
          %v595 = vld [vmem:[#allocation2 + $0x198] sm:$0xff]
          %v596 = vld [vmem:[#allocation2 + $0x1a0] sm:$0xff]
          %v597 = vld [vmem:[#allocation2 + $0x1a8] sm:$0xff]
          %v598 = vld [vmem:[#allocation2 + $0x1b0] sm:$0xff]
          %v599 = vld [vmem:[#allocation2 + $0x1b8] sm:$0xff]
          %v600 = vld [vmem:[#allocation2 + $0x1c0] sm:$0xff]
          %v601 = vld [vmem:[#allocation2 + $0x1c8] sm:$0xff]
          %v602 = vld [vmem:[#allocation2 + $0x1d0] sm:$0xff]
          %v603 = vld [vmem:[#allocation2 + $0x1d8] sm:$0xff]
          %v604 = vld [vmem:[#allocation2 + $0x1e0] sm:$0xff]
          %v605 = vld [vmem:[#allocation2 + $0x1e8] sm:$0xff]
          %v606 = vld [vmem:[#allocation2 + $0x1f0] sm:$0xff]
          %v607 = vld [vmem:[#allocation2 + $0x1f8] sm:$0xff]
          %v608 = vld [vmem:[#allocation18] ss:$4 sm:$0xf]
          %v610 = vperm.slane %v608, 0
          %v611 = vperm.slane %v608, 1
          %v612 = vperm.slane %v608, 2
          %v613 = vperm.slane %v608, 3
          %v682 = vunpack.c.l.b16 %v544
          %v683 = vunpack.c.h.b16 %v544
          %v684 = vunpack.c.l.b16 %v545
          %v685 = vunpack.c.h.b16 %v545
          %v686 = vunpack.c.l.b16 %v546
          %v687 = vunpack.c.h.b16 %v546
          %v688 = vunpack.c.l.b16 %v547
          %v689 = vunpack.c.h.b16 %v547
          %v690 = vunpack.c.l.b16 %v548
          %v691 = vunpack.c.h.b16 %v548
          %v692 = vunpack.c.l.b16 %v549
          %v693 = vunpack.c.h.b16 %v549
          %v694 = vunpack.c.l.b16 %v550
          %v695 = vunpack.c.h.b16 %v550
          %v696 = vunpack.c.l.b16 %v551
          %v697 = vunpack.c.h.b16 %v551
          %v698 = vunpack.c.l.b16 %v552
          %v699 = vunpack.c.h.b16 %v552
          %v700 = vunpack.c.l.b16 %v553
          %v701 = vunpack.c.h.b16 %v553
          %v702 = vunpack.c.l.b16 %v554
          %v703 = vunpack.c.h.b16 %v554
          %v704 = vunpack.c.l.b16 %v555
          %v705 = vunpack.c.h.b16 %v555
          %v706 = vunpack.c.l.b16 %v556
          %v707 = vunpack.c.h.b16 %v556
          %v708 = vunpack.c.l.b16 %v557
          %v709 = vunpack.c.h.b16 %v557
          %v710 = vunpack.c.l.b16 %v558
          %v711 = vunpack.c.h.b16 %v558
          %v712 = vunpack.c.l.b16 %v559
          %v713 = vunpack.c.h.b16 %v559
          %v714 = vunpack.c.l.b16 %v560
          %v715 = vunpack.c.h.b16 %v560
          %v716 = vunpack.c.l.b16 %v561
          %v717 = vunpack.c.h.b16 %v561
          %v718 = vunpack.c.l.b16 %v562
          %v719 = vunpack.c.h.b16 %v562
          %v720 = vunpack.c.l.b16 %v563
          %v721 = vunpack.c.h.b16 %v563
          %v722 = vunpack.c.l.b16 %v564
          %v723 = vunpack.c.h.b16 %v564
          %v724 = vunpack.c.l.b16 %v565
          %v725 = vunpack.c.h.b16 %v565
          %v726 = vunpack.c.l.b16 %v566
          %v727 = vunpack.c.h.b16 %v566
          %v728 = vunpack.c.l.b16 %v567
          %v729 = vunpack.c.h.b16 %v567
          %v730 = vunpack.c.l.b16 %v568
          %v731 = vunpack.c.h.b16 %v568
          %v732 = vunpack.c.l.b16 %v569
          %v733 = vunpack.c.h.b16 %v569
          %v734 = vunpack.c.l.b16 %v570
          %v735 = vunpack.c.h.b16 %v570
          %v736 = vunpack.c.l.b16 %v571
          %v737 = vunpack.c.h.b16 %v571
          %v738 = vunpack.c.l.b16 %v572
          %v739 = vunpack.c.h.b16 %v572
          %v740 = vunpack.c.l.b16 %v573
          %v741 = vunpack.c.h.b16 %v573
          %v742 = vunpack.c.l.b16 %v574
          %v743 = vunpack.c.h.b16 %v574
          %v744 = vunpack.c.l.b16 %v575
          %v745 = vunpack.c.h.b16 %v575
          %v746 = vunpack.c.l.b16 %v576
          %v747 = vunpack.c.h.b16 %v576
          %v748 = vunpack.c.l.b16 %v577
          %v749 = vunpack.c.h.b16 %v577
          %v750 = vunpack.c.l.b16 %v578
          %v751 = vunpack.c.h.b16 %v578
          %v752 = vunpack.c.l.b16 %v579
          %v753 = vunpack.c.h.b16 %v579
          %v754 = vunpack.c.l.b16 %v580
          %v755 = vunpack.c.h.b16 %v580
          %v756 = vunpack.c.l.b16 %v581
          %v757 = vunpack.c.h.b16 %v581
          %v758 = vunpack.c.l.b16 %v582
          %v759 = vunpack.c.h.b16 %v582
          %v760 = vunpack.c.l.b16 %v583
          %v761 = vunpack.c.h.b16 %v583
          %v762 = vunpack.c.l.b16 %v584
          %v763 = vunpack.c.h.b16 %v584
          %v764 = vunpack.c.l.b16 %v585
          %v765 = vunpack.c.h.b16 %v585
          %v766 = vunpack.c.l.b16 %v586
          %v767 = vunpack.c.h.b16 %v586
          %v768 = vunpack.c.l.b16 %v587
          %v769 = vunpack.c.h.b16 %v587
          %v770 = vunpack.c.l.b16 %v588
          %v771 = vunpack.c.h.b16 %v588
          %v772 = vunpack.c.l.b16 %v589
          %v773 = vunpack.c.h.b16 %v589
          %v774 = vunpack.c.l.b16 %v590
          %v775 = vunpack.c.h.b16 %v590
          %v776 = vunpack.c.l.b16 %v591
          %v777 = vunpack.c.h.b16 %v591
          %v778 = vunpack.c.l.b16 %v592
          %v779 = vunpack.c.h.b16 %v592
          %v780 = vunpack.c.l.b16 %v593
          %v781 = vunpack.c.h.b16 %v593
          %v782 = vunpack.c.l.b16 %v594
          %v783 = vunpack.c.h.b16 %v594
          %v784 = vunpack.c.l.b16 %v595
          %v785 = vunpack.c.h.b16 %v595
          %v786 = vunpack.c.l.b16 %v596
          %v787 = vunpack.c.h.b16 %v596
          %v788 = vunpack.c.l.b16 %v597
          %v789 = vunpack.c.h.b16 %v597
          %v790 = vunpack.c.l.b16 %v598
          %v791 = vunpack.c.h.b16 %v598
          %v792 = vunpack.c.l.b16 %v599
          %v793 = vunpack.c.h.b16 %v599
          %v794 = vunpack.c.l.b16 %v600
          %v795 = vunpack.c.h.b16 %v600
          %v796 = vunpack.c.l.b16 %v601
          %v797 = vunpack.c.h.b16 %v601
          %v798 = vunpack.c.l.b16 %v602
          %v799 = vunpack.c.h.b16 %v602
          %v800 = vunpack.c.l.b16 %v603
          %v801 = vunpack.c.h.b16 %v603
          %v802 = vunpack.c.l.b16 %v604
          %v803 = vunpack.c.h.b16 %v604
          %v804 = vunpack.c.l.b16 %v605
          %v805 = vunpack.c.h.b16 %v605
          %v806 = vunpack.c.l.b16 %v606
          %v807 = vunpack.c.h.b16 %v606
          %v808 = vunpack.c.l.b16 %v607
          %v809 = vunpack.c.h.b16 %v607
          %v810 = vpack.c.b16 %v686, %v682
          %v811 = vpack.c.b16 %v687, %v683
          %v812 = vpack.c.b16 %v688, %v684
          %v813 = vpack.c.b16 %v689, %v685
          %v814 = vpack.c.b16 %v694, %v690
          %v815 = vpack.c.b16 %v695, %v691
          %v816 = vpack.c.b16 %v696, %v692
          %v817 = vpack.c.b16 %v697, %v693
          %v818 = vpack.c.b16 %v702, %v698
          %v819 = vpack.c.b16 %v703, %v699
          %v820 = vpack.c.b16 %v704, %v700
          %v821 = vpack.c.b16 %v705, %v701
          %v822 = vpack.c.b16 %v710, %v706
          %v823 = vpack.c.b16 %v711, %v707
          %v824 = vpack.c.b16 %v712, %v708
          %v825 = vpack.c.b16 %v713, %v709
          %v826 = vpack.c.b16 %v718, %v714
          %v827 = vpack.c.b16 %v719, %v715
          %v828 = vpack.c.b16 %v720, %v716
          %v829 = vpack.c.b16 %v721, %v717
          %v830 = vpack.c.b16 %v726, %v722
          %v831 = vpack.c.b16 %v727, %v723
          %v832 = vpack.c.b16 %v728, %v724
          %v833 = vpack.c.b16 %v729, %v725
          %v834 = vpack.c.b16 %v734, %v730
          %v835 = vpack.c.b16 %v735, %v731
          %v836 = vpack.c.b16 %v736, %v732
          %v837 = vpack.c.b16 %v737, %v733
          %v838 = vpack.c.b16 %v742, %v738
          %v839 = vpack.c.b16 %v743, %v739
          %v840 = vpack.c.b16 %v744, %v740
          %v841 = vpack.c.b16 %v745, %v741
          %v842 = vpack.c.b16 %v750, %v746
          %v843 = vpack.c.b16 %v751, %v747
          %v844 = vpack.c.b16 %v752, %v748
          %v845 = vpack.c.b16 %v753, %v749
          %v846 = vpack.c.b16 %v758, %v754
          %v847 = vpack.c.b16 %v759, %v755
          %v848 = vpack.c.b16 %v760, %v756
          %v849 = vpack.c.b16 %v761, %v757
          %v850 = vpack.c.b16 %v766, %v762
          %v851 = vpack.c.b16 %v767, %v763
          %v852 = vpack.c.b16 %v768, %v764
          %v853 = vpack.c.b16 %v769, %v765
          %v854 = vpack.c.b16 %v774, %v770
          %v855 = vpack.c.b16 %v775, %v771
          %v856 = vpack.c.b16 %v776, %v772
          %v857 = vpack.c.b16 %v777, %v773
          %v858 = vpack.c.b16 %v782, %v778
          %v859 = vpack.c.b16 %v783, %v779
          %v860 = vpack.c.b16 %v784, %v780
          %v861 = vpack.c.b16 %v785, %v781
          %v862 = vpack.c.b16 %v790, %v786
          %v863 = vpack.c.b16 %v791, %v787
          %v864 = vpack.c.b16 %v792, %v788
          %v865 = vpack.c.b16 %v793, %v789
          %v866 = vpack.c.b16 %v798, %v794
          %v867 = vpack.c.b16 %v799, %v795
          %v868 = vpack.c.b16 %v800, %v796
          %v869 = vpack.c.b16 %v801, %v797
          %v870 = vpack.c.b16 %v806, %v802
          %v871 = vpack.c.b16 %v807, %v803
          %v872 = vpack.c.b16 %v808, %v804
          %v873 = vpack.c.b16 %v809, %v805
          %938 = vmatpush.bf16.msra.mxu0 %v838
          %939 = vmatpush.bf16.msra.mxu0 %v834
          %940 = vmatpush.bf16.msra.mxu0 %v830
          %941 = vmatpush.bf16.msra.mxu0 %v826
          %942 = vmatpush.bf16.msra.mxu0 %v822
          %943 = vmatpush.bf16.msra.mxu0 %v818
          %944 = vmatpush.bf16.msra.mxu0 %v814
          %945 = vmatpush.bf16.msra.mxu0 %v810
          %946 = vmatmul.bf16.gmra.mxu0 %v542
          %v947 = vpop.f32.mrf.mxu0
          %v948 = vadd.f32 %v610, %v947
          %v949 = vpop.f32.mrf.mxu0
          %950 = vdwg.mxu0
          %951 = vmatpush.bf16.msra.mxu0 %v870
          %952 = vmatpush.bf16.msra.mxu0 %v866
          %953 = vmatpush.bf16.msra.mxu0 %v862
          %954 = vmatpush.bf16.msra.mxu0 %v858
          %955 = vmatpush.bf16.msra.mxu0 %v854
          %956 = vmatpush.bf16.msra.mxu0 %v850
          %957 = vmatpush.bf16.msra.mxu0 %v846
          %958 = vmatpush.bf16.msra.mxu0 %v842
          %959 = vmatmul.bf16.gmra.mxu0 %v543
          %v960 = vpop.f32.mrf.mxu0
          %v961 = vadd.f32 %v948, %v960
          %v962 = vpop.f32.mrf.mxu0
          %963 = vdwg.mxu0
          %964 = vmatpush.bf16.msra.mxu0 %v839
          %965 = vmatpush.bf16.msra.mxu0 %v835
          %966 = vmatpush.bf16.msra.mxu0 %v831
          %967 = vmatpush.bf16.msra.mxu0 %v827
          %968 = vmatpush.bf16.msra.mxu0 %v823
          %969 = vmatpush.bf16.msra.mxu0 %v819
          %970 = vmatpush.bf16.msra.mxu0 %v815
          %971 = vmatpush.bf16.msra.mxu0 %v811
          %972 = vmatmul.bf16.gmra.mxu0 %v542
          %v973 = vpop.f32.mrf.mxu0
          %v974 = vadd.f32 %v611, %v973
          %v975 = vpop.f32.mrf.mxu0
          %976 = vdwg.mxu0
          %977 = vmatpush.bf16.msra.mxu0 %v871
          %978 = vmatpush.bf16.msra.mxu0 %v867
          %979 = vmatpush.bf16.msra.mxu0 %v863
          %980 = vmatpush.bf16.msra.mxu0 %v859
          %981 = vmatpush.bf16.msra.mxu0 %v855
          %982 = vmatpush.bf16.msra.mxu0 %v851
          %983 = vmatpush.bf16.msra.mxu0 %v847
          %984 = vmatpush.bf16.msra.mxu0 %v843
          %985 = vmatmul.bf16.gmra.mxu0 %v543
          %v986 = vpop.f32.mrf.mxu0
          %v987 = vadd.f32 %v974, %v986
          %v988 = vpop.f32.mrf.mxu0
          %989 = vdwg.mxu0
          %990 = vmatpush.bf16.msra.mxu0 %v840
          %991 = vmatpush.bf16.msra.mxu0 %v836
          %992 = vmatpush.bf16.msra.mxu0 %v832
          %993 = vmatpush.bf16.msra.mxu0 %v828
          %994 = vmatpush.bf16.msra.mxu0 %v824
          %995 = vmatpush.bf16.msra.mxu0 %v820
          %996 = vmatpush.bf16.msra.mxu0 %v816
          %997 = vmatpush.bf16.msra.mxu0 %v812
          %998 = vmatmul.bf16.gmra.mxu0 %v542
          %v999 = vpop.f32.mrf.mxu0
          %v1000 = vadd.f32 %v612, %v999
          %v1001 = vpop.f32.mrf.mxu0
          %1002 = vdwg.mxu0
          %1003 = vmatpush.bf16.msra.mxu0 %v872
          %1004 = vmatpush.bf16.msra.mxu0 %v868
          %1005 = vmatpush.bf16.msra.mxu0 %v864
          %1006 = vmatpush.bf16.msra.mxu0 %v860
          %1007 = vmatpush.bf16.msra.mxu0 %v856
          %1008 = vmatpush.bf16.msra.mxu0 %v852
          %1009 = vmatpush.bf16.msra.mxu0 %v848
          %1010 = vmatpush.bf16.msra.mxu0 %v844
          %1011 = vmatmul.bf16.gmra.mxu0 %v543
          %v1012 = vpop.f32.mrf.mxu0
          %v1013 = vadd.f32 %v1000, %v1012
          %v1014 = vpop.f32.mrf.mxu0
          %1015 = vdwg.mxu0
          %1016 = vmatpush.bf16.msra.mxu0 %v841
          %1017 = vmatpush.bf16.msra.mxu0 %v837
          %1018 = vmatpush.bf16.msra.mxu0 %v833
          %1019 = vmatpush.bf16.msra.mxu0 %v829
          %1020 = vmatpush.bf16.msra.mxu0 %v825
          %1021 = vmatpush.bf16.msra.mxu0 %v821
          %1022 = vmatpush.bf16.msra.mxu0 %v817
          %1023 = vmatpush.bf16.msra.mxu0 %v813
          %1024 = vmatmul.bf16.gmra.mxu0 %v542
          %v1025 = vpop.f32.mrf.mxu0
          %v1026 = vadd.f32 %v613, %v1025
          %v1027 = vpop.f32.mrf.mxu0
          %1028 = vdwg.mxu0
          %1029 = vmatpush.bf16.msra.mxu0 %v873
          %1030 = vmatpush.bf16.msra.mxu0 %v869
          %1031 = vmatpush.bf16.msra.mxu0 %v865
          %1032 = vmatpush.bf16.msra.mxu0 %v861
          %1033 = vmatpush.bf16.msra.mxu0 %v857
          %1034 = vmatpush.bf16.msra.mxu0 %v853
          %1035 = vmatpush.bf16.msra.mxu0 %v849
          %1036 = vmatpush.bf16.msra.mxu0 %v845
          %1037 = vmatmul.bf16.gmra.mxu0 %v543
          %v1038 = vpop.f32.mrf.mxu0
          %v1039 = vadd.f32 %v1026, %v1038
          %v1040 = vpop.f32.mrf.mxu0
          %1041 = vdwg.mxu0
          %v1042 = vmax.f32 %v961, 0.0
          %v1043 = vmax.f32 %v987, 0.0
          %v1044 = vmax.f32 %v1013, 0.0
          %v1045 = vmax.f32 %v1039, 0.0
          %s1046 = smul.u32 %s521, 4
          %s1047 = smul.addr %s1046, 8
          %s1048 = scalar_lea.vmem [#allocation7], %s1047
          %1049 = vst [vmem:[%s1048] sm:$0xff] %v1042
          %1050 = vst [vmem:[%s1048 + $0x8] sm:$0xff] %v1043
          %1051 = vst [vmem:[%s1048 + $0x10] sm:$0xff] %v1044
          %1052 = vst [vmem:[%s1048 + $0x18] sm:$0xff] %v1045
          // Predicated region
          $region97: #{tpu_custom_call.1} parent=91 // pred_check
            %p1053 = pneg %p321
          $region98: #{tpu_custom_call.1} parent=91 // pred_check_branch
            %1055 = sbr.rel (%p1053) target = $region100
          $region99: #{tpu_custom_call.1} parent=91 // pred_region
            %1056 = vst [vmem:[#allocation10] sm:$0xff] 0.0
          $region100: #{tpu_custom_call.1} parent=91 // pred_fallthru
            _
          %v1057 = vld [vmem:[#allocation10] ss:$2 sm:$0xf]
          %v1058 = vrot.slane %v1042, 4
          %v1059 = vadd.f32 %v1042, %v1058
          %v1060 = vrot.slane %v1059, 2
          %v1061 = vadd.f32 %v1059, %v1060
          %v1062 = vrot.slane %v1061, 1
          %v1063 = vadd.f32 %v1061, %v1062
          %v1064 = vrot.slane %v1043, 4
          %v1065 = vadd.f32 %v1043, %v1064
          %v1066 = vrot.slane %v1065, 2
          %v1067 = vadd.f32 %v1065, %v1066
          %v1068 = vrot.slane %v1067, 1
          %v1069 = vadd.f32 %v1067, %v1068
          %v1070 = vrot.slane %v1044, 4
          %v1071 = vadd.f32 %v1044, %v1070
          %v1072 = vrot.slane %v1071, 2
          %v1073 = vadd.f32 %v1071, %v1072
          %v1074 = vrot.slane %v1073, 1
          %v1075 = vadd.f32 %v1073, %v1074
          %v1076 = vrot.slane %v1045, 4
          %v1077 = vadd.f32 %v1045, %v1076
          %v1078 = vrot.slane %v1077, 2
          %v1079 = vadd.f32 %v1077, %v1078
          %v1080 = vrot.slane %v1079, 1
          %v1081 = vadd.f32 %v1079, %v1080
          %v1086 = vrot.slane %v1069, 7
          %v1087 = vrot.slane %v1075, 6
          %v1088 = vrot.slane %v1081, 5
          %vm1089 = vcmask 1040384
          %v1090 = vsel %vm1089, %v1063, %v1086
          %vm1091 = vcmask 1042434
          %v1092 = vsel %vm1091, %v1087, %v1088
          %vm1093 = vcmask 1041408
          %v1094 = vsel %vm1093, %v1090, %v1092
          %v1096 = vadd.f32 %v1057, %v1094
          %v1097 = vlaneseq
          %vm1098 = vcmp.ge.s32.totalorder %v1097, 0
          %vm1099 = vcmp.lt.s32.totalorder %v1097, 512
          %vm1100 = vmand %vm1098, %vm1099
          %1101 = vst.msk [vmem:[#allocation10] ss:$2 sm:$0xf] %vm1100, %v1096
          %s1102 = scalar_lea.vmem [#allocation10], 1
          %v1103 = vld [vmem:[%s1102] ss:$2 sm:$0xf]
          %v1104 = vmul.f32 %v1042, %v1042
          %v1105 = vmul.f32 %v1043, %v1043
          %v1106 = vmul.f32 %v1044, %v1044
          %v1107 = vmul.f32 %v1045, %v1045
          %v1108 = vrot.slane %v1104, 4
          %v1109 = vadd.f32 %v1104, %v1108
          %v1110 = vrot.slane %v1109, 2
          %v1111 = vadd.f32 %v1109, %v1110
          %v1112 = vrot.slane %v1111, 1
          %v1113 = vadd.f32 %v1111, %v1112
          %v1114 = vrot.slane %v1105, 4
          %v1115 = vadd.f32 %v1105, %v1114
          %v1116 = vrot.slane %v1115, 2
          %v1117 = vadd.f32 %v1115, %v1116
          %v1118 = vrot.slane %v1117, 1
          %v1119 = vadd.f32 %v1117, %v1118
          %v1120 = vrot.slane %v1106, 4
          %v1121 = vadd.f32 %v1106, %v1120
          %v1122 = vrot.slane %v1121, 2
          %v1123 = vadd.f32 %v1121, %v1122
          %v1124 = vrot.slane %v1123, 1
          %v1125 = vadd.f32 %v1123, %v1124
          %v1126 = vrot.slane %v1107, 4
          %v1127 = vadd.f32 %v1107, %v1126
          %v1128 = vrot.slane %v1127, 2
          %v1129 = vadd.f32 %v1127, %v1128
          %v1130 = vrot.slane %v1129, 1
          %v1131 = vadd.f32 %v1129, %v1130
          %v1136 = vrot.slane %v1119, 7
          %v1137 = vrot.slane %v1125, 6
          %v1138 = vrot.slane %v1131, 5
          %v1139 = vsel %vm1089, %v1113, %v1136
          %v1140 = vsel %vm1091, %v1137, %v1138
          %v1141 = vsel %vm1093, %v1139, %v1140
          %v1143 = vadd.f32 %v1103, %v1141
          %1144 = vst.msk [vmem:[%s1102] ss:$2 sm:$0xf] %vm1100, %v1143
        $region92: #{tpu_custom_call.1} parent=43 // pred_fallthru
          _
        %p1145 = scmp.eq.s32.totalorder %s28, 2
        // Predicated region
        $region101: #{tpu_custom_call.1} parent=43 // pred_check
          %p1146 = pneg %p1145
        $region102: #{tpu_custom_call.1} parent=43 // pred_check_branch
          %1148 = sbr.rel (%p1146) target = $region104
        $region103: #{tpu_custom_call.1} parent=43 // pred_region
          // Predicated region
          $region105: #{tpu_custom_call.1} parent=103 // pred_check
            %p1149 = pneg %p321
          $region106: #{tpu_custom_call.1} parent=103 // pred_check_branch
            %1151 = sbr.rel (%p1149) target = $region108
          $region107: #{tpu_custom_call.1} parent=103 // pred_region
            %s1152 = scalar_lea.sflag [#allocation5], 1
            %s1153 = smul.u32 4, 64
            %s1154 = smul.u32 %s1153, 2
            %s1155 = sshll.u32 %s1154, 4
            %1156 = dma.done %s1152, %s1155
          $region108: #{tpu_custom_call.1} parent=103 // pred_fallthru
            _
          %v1157 = vld [vmem:[#allocation10] ss:$2 sm:$0xf]
          %v1158 = vmul.f32 %v1157, 0.125
          %s1159 = scalar_lea.vmem [#allocation10], 1
          %v1160 = vld [vmem:[%s1159] ss:$2 sm:$0xf]
          %v1161 = vmul.f32 %v1160, 0.125
          %v1162 = vmul.f32 %v1158, %v1158
          %v1163 = vsub.f32 %v1161, %v1162
          %s1164 = scalar_lea.vmem [#allocation18], 1
          %v1165 = vld [vmem:[%s1164] ss:$4 sm:$0xf]
          %v1166 = vadd.f32 %v1163, 1e-05
          %v1167 = vrsqrt.pop %v1166
          %v1168 = vmul.f32 %v1167, %v1166
          %v1169 = vmul.f32 %v1168, %v1167
          %v1170 = vmul.f32 0.5, %v1169
          %v1171 = vsub.f32 1.5, %v1170
          %v1172 = vmul.f32 %v1167, %v1171
          %vm1173 = vweird.f32 %v1166
          %vm1174 = vweird.f32 %v1167
          %vm1175 = vmor %vm1173, %vm1174
          %v1176 = vsel %vm1175, %v1167, %v1172
          %v1177 = vmul.f32 %v1165, %v1176
          %s1178 = scalar_lea.vmem [#allocation18], 2
          %v1179 = vld [vmem:[%s1178] ss:$4 sm:$0xf]
          %v1180 = vmul.f32 %v1158, %v1177
          %v1181 = vsub.f32 %v1179, %v1180
          %s1182 = sshra.s32 %s319, 3
          %s1183 = sand.u32 %s319, 7
          %s1184 = smul.u32 %s1182, 4
          %s1185 = smul.addr %s1184, 8
          %s1186 = scalar_lea.vmem [#allocation7], %s1185
          %v1187 = vld [vmem:[%s1186] sm:$0xff]
          %v1188 = vld [vmem:[%s1186 + $0x8] sm:$0xff]
          %v1189 = vld [vmem:[%s1186 + $0x10] sm:$0xff]
          %v1190 = vld [vmem:[%s1186 + $0x18] sm:$0xff]
          %v1192 = vperm.slane %v1177, 0
          %v1193 = vperm.slane %v1177, 1
          %v1194 = vperm.slane %v1177, 2
          %v1195 = vperm.slane %v1177, 3
          %v1200 = vmul.f32 %v1187, %v1192
          %v1201 = vmul.f32 %v1188, %v1193
          %v1202 = vmul.f32 %v1189, %v1194
          %v1203 = vmul.f32 %v1190, %v1195
          %v1205 = vperm.slane %v1181, 0
          %v1206 = vperm.slane %v1181, 1
          %v1207 = vperm.slane %v1181, 2
          %v1208 = vperm.slane %v1181, 3
          %v1213 = vadd.f32 %v1200, %v1205
          %v1214 = vadd.f32 %v1201, %v1206
          %v1215 = vadd.f32 %v1202, %v1207
          %v1216 = vadd.f32 %v1203, %v1208
          %v1217 = vpack.c.bf16 %v1213, %v1213
          %v1218 = vpack.c.bf16 %v1214, %v1214
          %v1219 = vpack.c.bf16 %v1215, %v1215
          %v1220 = vpack.c.bf16 %v1216, %v1216
          %v1221 = vld [vmem:[#allocation3] sm:$0xff]
          %v1222 = vld [vmem:[#allocation3 + $0x8] sm:$0xff]
          %v1223 = vld [vmem:[#allocation3 + $0x10] sm:$0xff]
          %v1224 = vld [vmem:[#allocation3 + $0x18] sm:$0xff]
          %v1225 = vld [vmem:[#allocation3 + $0x20] sm:$0xff]
          %v1226 = vld [vmem:[#allocation3 + $0x28] sm:$0xff]
          %v1227 = vld [vmem:[#allocation3 + $0x30] sm:$0xff]
          %v1228 = vld [vmem:[#allocation3 + $0x38] sm:$0xff]
          %v1229 = vld [vmem:[#allocation3 + $0x40] sm:$0xff]
          %v1230 = vld [vmem:[#allocation3 + $0x48] sm:$0xff]
          %v1231 = vld [vmem:[#allocation3 + $0x50] sm:$0xff]
          %v1232 = vld [vmem:[#allocation3 + $0x58] sm:$0xff]
          %v1233 = vld [vmem:[#allocation3 + $0x60] sm:$0xff]
          %v1234 = vld [vmem:[#allocation3 + $0x68] sm:$0xff]
          %v1235 = vld [vmem:[#allocation3 + $0x70] sm:$0xff]
          %v1236 = vld [vmem:[#allocation3 + $0x78] sm:$0xff]
          %v1237 = vld [vmem:[#allocation3 + $0x80] sm:$0xff]
          %v1238 = vld [vmem:[#allocation3 + $0x88] sm:$0xff]
          %v1239 = vld [vmem:[#allocation3 + $0x90] sm:$0xff]
          %v1240 = vld [vmem:[#allocation3 + $0x98] sm:$0xff]
          %v1241 = vld [vmem:[#allocation3 + $0xa0] sm:$0xff]
          %v1242 = vld [vmem:[#allocation3 + $0xa8] sm:$0xff]
          %v1243 = vld [vmem:[#allocation3 + $0xb0] sm:$0xff]
          %v1244 = vld [vmem:[#allocation3 + $0xb8] sm:$0xff]
          %v1245 = vld [vmem:[#allocation3 + $0xc0] sm:$0xff]
          %v1246 = vld [vmem:[#allocation3 + $0xc8] sm:$0xff]
          %v1247 = vld [vmem:[#allocation3 + $0xd0] sm:$0xff]
          %v1248 = vld [vmem:[#allocation3 + $0xd8] sm:$0xff]
          %v1249 = vld [vmem:[#allocation3 + $0xe0] sm:$0xff]
          %v1250 = vld [vmem:[#allocation3 + $0xe8] sm:$0xff]
          %v1251 = vld [vmem:[#allocation3 + $0xf0] sm:$0xff]
          %v1252 = vld [vmem:[#allocation3 + $0xf8] sm:$0xff]
          %v1253 = vld [vmem:[#allocation3 + $0x100] sm:$0xff]
          %v1254 = vld [vmem:[#allocation3 + $0x108] sm:$0xff]
          %v1255 = vld [vmem:[#allocation3 + $0x110] sm:$0xff]
          %v1256 = vld [vmem:[#allocation3 + $0x118] sm:$0xff]
          %v1257 = vld [vmem:[#allocation3 + $0x120] sm:$0xff]
          %v1258 = vld [vmem:[#allocation3 + $0x128] sm:$0xff]
          %v1259 = vld [vmem:[#allocation3 + $0x130] sm:$0xff]
          %v1260 = vld [vmem:[#allocation3 + $0x138] sm:$0xff]
          %v1261 = vld [vmem:[#allocation3 + $0x140] sm:$0xff]
          %v1262 = vld [vmem:[#allocation3 + $0x148] sm:$0xff]
          %v1263 = vld [vmem:[#allocation3 + $0x150] sm:$0xff]
          %v1264 = vld [vmem:[#allocation3 + $0x158] sm:$0xff]
          %v1265 = vld [vmem:[#allocation3 + $0x160] sm:$0xff]
          %v1266 = vld [vmem:[#allocation3 + $0x168] sm:$0xff]
          %v1267 = vld [vmem:[#allocation3 + $0x170] sm:$0xff]
          %v1268 = vld [vmem:[#allocation3 + $0x178] sm:$0xff]
          %v1269 = vld [vmem:[#allocation3 + $0x180] sm:$0xff]
          %v1270 = vld [vmem:[#allocation3 + $0x188] sm:$0xff]
          %v1271 = vld [vmem:[#allocation3 + $0x190] sm:$0xff]
          %v1272 = vld [vmem:[#allocation3 + $0x198] sm:$0xff]
          %v1273 = vld [vmem:[#allocation3 + $0x1a0] sm:$0xff]
          %v1274 = vld [vmem:[#allocation3 + $0x1a8] sm:$0xff]
          %v1275 = vld [vmem:[#allocation3 + $0x1b0] sm:$0xff]
          %v1276 = vld [vmem:[#allocation3 + $0x1b8] sm:$0xff]
          %v1277 = vld [vmem:[#allocation3 + $0x1c0] sm:$0xff]
          %v1278 = vld [vmem:[#allocation3 + $0x1c8] sm:$0xff]
          %v1279 = vld [vmem:[#allocation3 + $0x1d0] sm:$0xff]
          %v1280 = vld [vmem:[#allocation3 + $0x1d8] sm:$0xff]
          %v1281 = vld [vmem:[#allocation3 + $0x1e0] sm:$0xff]
          %v1282 = vld [vmem:[#allocation3 + $0x1e8] sm:$0xff]
          %v1283 = vld [vmem:[#allocation3 + $0x1f0] sm:$0xff]
          %v1284 = vld [vmem:[#allocation3 + $0x1f8] sm:$0xff]
          %v1285 = vld [vmem:[#allocation20] ss:$4 sm:$0x3]
          %v1287 = vperm.slane %v1285, 0
          %v1288 = vperm.slane %v1285, 1
          %v1355 = vunpack.c.l.b16 %v1221
          %v1356 = vunpack.c.h.b16 %v1221
          %v1357 = vunpack.c.l.b16 %v1222
          %v1358 = vunpack.c.h.b16 %v1222
          %v1359 = vunpack.c.l.b16 %v1223
          %v1360 = vunpack.c.h.b16 %v1223
          %v1361 = vunpack.c.l.b16 %v1224
          %v1362 = vunpack.c.h.b16 %v1224
          %v1363 = vunpack.c.l.b16 %v1225
          %v1364 = vunpack.c.h.b16 %v1225
          %v1365 = vunpack.c.l.b16 %v1226
          %v1366 = vunpack.c.h.b16 %v1226
          %v1367 = vunpack.c.l.b16 %v1227
          %v1368 = vunpack.c.h.b16 %v1227
          %v1369 = vunpack.c.l.b16 %v1228
          %v1370 = vunpack.c.h.b16 %v1228
          %v1371 = vunpack.c.l.b16 %v1229
          %v1372 = vunpack.c.h.b16 %v1229
          %v1373 = vunpack.c.l.b16 %v1230
          %v1374 = vunpack.c.h.b16 %v1230
          %v1375 = vunpack.c.l.b16 %v1231
          %v1376 = vunpack.c.h.b16 %v1231
          %v1377 = vunpack.c.l.b16 %v1232
          %v1378 = vunpack.c.h.b16 %v1232
          %v1379 = vunpack.c.l.b16 %v1233
          %v1380 = vunpack.c.h.b16 %v1233
          %v1381 = vunpack.c.l.b16 %v1234
          %v1382 = vunpack.c.h.b16 %v1234
          %v1383 = vunpack.c.l.b16 %v1235
          %v1384 = vunpack.c.h.b16 %v1235
          %v1385 = vunpack.c.l.b16 %v1236
          %v1386 = vunpack.c.h.b16 %v1236
          %v1387 = vunpack.c.l.b16 %v1237
          %v1388 = vunpack.c.h.b16 %v1237
          %v1389 = vunpack.c.l.b16 %v1238
          %v1390 = vunpack.c.h.b16 %v1238
          %v1391 = vunpack.c.l.b16 %v1239
          %v1392 = vunpack.c.h.b16 %v1239
          %v1393 = vunpack.c.l.b16 %v1240
          %v1394 = vunpack.c.h.b16 %v1240
          %v1395 = vunpack.c.l.b16 %v1241
          %v1396 = vunpack.c.h.b16 %v1241
          %v1397 = vunpack.c.l.b16 %v1242
          %v1398 = vunpack.c.h.b16 %v1242
          %v1399 = vunpack.c.l.b16 %v1243
          %v1400 = vunpack.c.h.b16 %v1243
          %v1401 = vunpack.c.l.b16 %v1244
          %v1402 = vunpack.c.h.b16 %v1244
          %v1403 = vunpack.c.l.b16 %v1245
          %v1404 = vunpack.c.h.b16 %v1245
          %v1405 = vunpack.c.l.b16 %v1246
          %v1406 = vunpack.c.h.b16 %v1246
          %v1407 = vunpack.c.l.b16 %v1247
          %v1408 = vunpack.c.h.b16 %v1247
          %v1409 = vunpack.c.l.b16 %v1248
          %v1410 = vunpack.c.h.b16 %v1248
          %v1411 = vunpack.c.l.b16 %v1249
          %v1412 = vunpack.c.h.b16 %v1249
          %v1413 = vunpack.c.l.b16 %v1250
          %v1414 = vunpack.c.h.b16 %v1250
          %v1415 = vunpack.c.l.b16 %v1251
          %v1416 = vunpack.c.h.b16 %v1251
          %v1417 = vunpack.c.l.b16 %v1252
          %v1418 = vunpack.c.h.b16 %v1252
          %v1419 = vunpack.c.l.b16 %v1253
          %v1420 = vunpack.c.h.b16 %v1253
          %v1421 = vunpack.c.l.b16 %v1254
          %v1422 = vunpack.c.h.b16 %v1254
          %v1423 = vunpack.c.l.b16 %v1255
          %v1424 = vunpack.c.h.b16 %v1255
          %v1425 = vunpack.c.l.b16 %v1256
          %v1426 = vunpack.c.h.b16 %v1256
          %v1427 = vunpack.c.l.b16 %v1257
          %v1428 = vunpack.c.h.b16 %v1257
          %v1429 = vunpack.c.l.b16 %v1258
          %v1430 = vunpack.c.h.b16 %v1258
          %v1431 = vunpack.c.l.b16 %v1259
          %v1432 = vunpack.c.h.b16 %v1259
          %v1433 = vunpack.c.l.b16 %v1260
          %v1434 = vunpack.c.h.b16 %v1260
          %v1435 = vunpack.c.l.b16 %v1261
          %v1436 = vunpack.c.h.b16 %v1261
          %v1437 = vunpack.c.l.b16 %v1262
          %v1438 = vunpack.c.h.b16 %v1262
          %v1439 = vunpack.c.l.b16 %v1263
          %v1440 = vunpack.c.h.b16 %v1263
          %v1441 = vunpack.c.l.b16 %v1264
          %v1442 = vunpack.c.h.b16 %v1264
          %v1443 = vunpack.c.l.b16 %v1265
          %v1444 = vunpack.c.h.b16 %v1265
          %v1445 = vunpack.c.l.b16 %v1266
          %v1446 = vunpack.c.h.b16 %v1266
          %v1447 = vunpack.c.l.b16 %v1267
          %v1448 = vunpack.c.h.b16 %v1267
          %v1449 = vunpack.c.l.b16 %v1268
          %v1450 = vunpack.c.h.b16 %v1268
          %v1451 = vunpack.c.l.b16 %v1269
          %v1452 = vunpack.c.h.b16 %v1269
          %v1453 = vunpack.c.l.b16 %v1270
          %v1454 = vunpack.c.h.b16 %v1270
          %v1455 = vunpack.c.l.b16 %v1271
          %v1456 = vunpack.c.h.b16 %v1271
          %v1457 = vunpack.c.l.b16 %v1272
          %v1458 = vunpack.c.h.b16 %v1272
          %v1459 = vunpack.c.l.b16 %v1273
          %v1460 = vunpack.c.h.b16 %v1273
          %v1461 = vunpack.c.l.b16 %v1274
          %v1462 = vunpack.c.h.b16 %v1274
          %v1463 = vunpack.c.l.b16 %v1275
          %v1464 = vunpack.c.h.b16 %v1275
          %v1465 = vunpack.c.l.b16 %v1276
          %v1466 = vunpack.c.h.b16 %v1276
          %v1467 = vunpack.c.l.b16 %v1277
          %v1468 = vunpack.c.h.b16 %v1277
          %v1469 = vunpack.c.l.b16 %v1278
          %v1470 = vunpack.c.h.b16 %v1278
          %v1471 = vunpack.c.l.b16 %v1279
          %v1472 = vunpack.c.h.b16 %v1279
          %v1473 = vunpack.c.l.b16 %v1280
          %v1474 = vunpack.c.h.b16 %v1280
          %v1475 = vunpack.c.l.b16 %v1281
          %v1476 = vunpack.c.h.b16 %v1281
          %v1477 = vunpack.c.l.b16 %v1282
          %v1478 = vunpack.c.h.b16 %v1282
          %v1479 = vunpack.c.l.b16 %v1283
          %v1480 = vunpack.c.h.b16 %v1283
          %v1481 = vunpack.c.l.b16 %v1284
          %v1482 = vunpack.c.h.b16 %v1284
          %v1483 = vpack.c.b16 %v1357, %v1355
          %v1484 = vpack.c.b16 %v1358, %v1356
          %v1485 = vpack.c.b16 %v1361, %v1359
          %v1486 = vpack.c.b16 %v1362, %v1360
          %v1487 = vpack.c.b16 %v1365, %v1363
          %v1488 = vpack.c.b16 %v1366, %v1364
          %v1489 = vpack.c.b16 %v1369, %v1367
          %v1490 = vpack.c.b16 %v1370, %v1368
          %v1491 = vpack.c.b16 %v1373, %v1371
          %v1492 = vpack.c.b16 %v1374, %v1372
          %v1493 = vpack.c.b16 %v1377, %v1375
          %v1494 = vpack.c.b16 %v1378, %v1376
          %v1495 = vpack.c.b16 %v1381, %v1379
          %v1496 = vpack.c.b16 %v1382, %v1380
          %v1497 = vpack.c.b16 %v1385, %v1383
          %v1498 = vpack.c.b16 %v1386, %v1384
          %v1499 = vpack.c.b16 %v1389, %v1387
          %v1500 = vpack.c.b16 %v1390, %v1388
          %v1501 = vpack.c.b16 %v1393, %v1391
          %v1502 = vpack.c.b16 %v1394, %v1392
          %v1503 = vpack.c.b16 %v1397, %v1395
          %v1504 = vpack.c.b16 %v1398, %v1396
          %v1505 = vpack.c.b16 %v1401, %v1399
          %v1506 = vpack.c.b16 %v1402, %v1400
          %v1507 = vpack.c.b16 %v1405, %v1403
          %v1508 = vpack.c.b16 %v1406, %v1404
          %v1509 = vpack.c.b16 %v1409, %v1407
          %v1510 = vpack.c.b16 %v1410, %v1408
          %v1511 = vpack.c.b16 %v1413, %v1411
          %v1512 = vpack.c.b16 %v1414, %v1412
          %v1513 = vpack.c.b16 %v1417, %v1415
          %v1514 = vpack.c.b16 %v1418, %v1416
          %v1515 = vpack.c.b16 %v1421, %v1419
          %v1516 = vpack.c.b16 %v1422, %v1420
          %v1517 = vpack.c.b16 %v1425, %v1423
          %v1518 = vpack.c.b16 %v1426, %v1424
          %v1519 = vpack.c.b16 %v1429, %v1427
          %v1520 = vpack.c.b16 %v1430, %v1428
          %v1521 = vpack.c.b16 %v1433, %v1431
          %v1522 = vpack.c.b16 %v1434, %v1432
          %v1523 = vpack.c.b16 %v1437, %v1435
          %v1524 = vpack.c.b16 %v1438, %v1436
          %v1525 = vpack.c.b16 %v1441, %v1439
          %v1526 = vpack.c.b16 %v1442, %v1440
          %v1527 = vpack.c.b16 %v1445, %v1443
          %v1528 = vpack.c.b16 %v1446, %v1444
          %v1529 = vpack.c.b16 %v1449, %v1447
          %v1530 = vpack.c.b16 %v1450, %v1448
          %v1531 = vpack.c.b16 %v1453, %v1451
          %v1532 = vpack.c.b16 %v1454, %v1452
          %v1533 = vpack.c.b16 %v1457, %v1455
          %v1534 = vpack.c.b16 %v1458, %v1456
          %v1535 = vpack.c.b16 %v1461, %v1459
          %v1536 = vpack.c.b16 %v1462, %v1460
          %v1537 = vpack.c.b16 %v1465, %v1463
          %v1538 = vpack.c.b16 %v1466, %v1464
          %v1539 = vpack.c.b16 %v1469, %v1467
          %v1540 = vpack.c.b16 %v1470, %v1468
          %v1541 = vpack.c.b16 %v1473, %v1471
          %v1542 = vpack.c.b16 %v1474, %v1472
          %v1543 = vpack.c.b16 %v1477, %v1475
          %v1544 = vpack.c.b16 %v1478, %v1476
          %v1545 = vpack.c.b16 %v1481, %v1479
          %v1546 = vpack.c.b16 %v1482, %v1480
          %1611 = vmatpush.bf16.msra.mxu0 %v1497
          %1612 = vmatpush.bf16.msra.mxu0 %v1495
          %1613 = vmatpush.bf16.msra.mxu0 %v1493
          %1614 = vmatpush.bf16.msra.mxu0 %v1491
          %1615 = vmatpush.bf16.msra.mxu0 %v1489
          %1616 = vmatpush.bf16.msra.mxu0 %v1487
          %1617 = vmatpush.bf16.msra.mxu0 %v1485
          %1618 = vmatpush.bf16.msra.mxu0 %v1483
          %1619 = vmatmul.bf16.gmra.mxu0 %v1217
          %v1620 = vpop.f32.mrf.mxu0
          %v1621 = vadd.f32 %v1287, %v1620
          %v1622 = vpop.f32.mrf.mxu0
          %1623 = vdwg.mxu0
          %1624 = vmatpush.bf16.msra.mxu0 %v1513
          %1625 = vmatpush.bf16.msra.mxu0 %v1511
          %1626 = vmatpush.bf16.msra.mxu0 %v1509
          %1627 = vmatpush.bf16.msra.mxu0 %v1507
          %1628 = vmatpush.bf16.msra.mxu0 %v1505
          %1629 = vmatpush.bf16.msra.mxu0 %v1503
          %1630 = vmatpush.bf16.msra.mxu0 %v1501
          %1631 = vmatpush.bf16.msra.mxu0 %v1499
          %1632 = vmatmul.bf16.gmra.mxu0 %v1218
          %v1633 = vpop.f32.mrf.mxu0
          %v1634 = vadd.f32 %v1621, %v1633
          %v1635 = vpop.f32.mrf.mxu0
          %1636 = vdwg.mxu0
          %1637 = vmatpush.bf16.msra.mxu0 %v1529
          %1638 = vmatpush.bf16.msra.mxu0 %v1527
          %1639 = vmatpush.bf16.msra.mxu0 %v1525
          %1640 = vmatpush.bf16.msra.mxu0 %v1523
          %1641 = vmatpush.bf16.msra.mxu0 %v1521
          %1642 = vmatpush.bf16.msra.mxu0 %v1519
          %1643 = vmatpush.bf16.msra.mxu0 %v1517
          %1644 = vmatpush.bf16.msra.mxu0 %v1515
          %1645 = vmatmul.bf16.gmra.mxu0 %v1219
          %v1646 = vpop.f32.mrf.mxu0
          %v1647 = vadd.f32 %v1634, %v1646
          %v1648 = vpop.f32.mrf.mxu0
          %1649 = vdwg.mxu0
          %1650 = vmatpush.bf16.msra.mxu0 %v1545
          %1651 = vmatpush.bf16.msra.mxu0 %v1543
          %1652 = vmatpush.bf16.msra.mxu0 %v1541
          %1653 = vmatpush.bf16.msra.mxu0 %v1539
          %1654 = vmatpush.bf16.msra.mxu0 %v1537
          %1655 = vmatpush.bf16.msra.mxu0 %v1535
          %1656 = vmatpush.bf16.msra.mxu0 %v1533
          %1657 = vmatpush.bf16.msra.mxu0 %v1531
          %1658 = vmatmul.bf16.gmra.mxu0 %v1220
          %v1659 = vpop.f32.mrf.mxu0
          %v1660 = vadd.f32 %v1647, %v1659
          %v1661 = vpop.f32.mrf.mxu0
          %1662 = vdwg.mxu0
          %1663 = vmatpush.bf16.msra.mxu0 %v1498
          %1664 = vmatpush.bf16.msra.mxu0 %v1496
          %1665 = vmatpush.bf16.msra.mxu0 %v1494
          %1666 = vmatpush.bf16.msra.mxu0 %v1492
          %1667 = vmatpush.bf16.msra.mxu0 %v1490
          %1668 = vmatpush.bf16.msra.mxu0 %v1488
          %1669 = vmatpush.bf16.msra.mxu0 %v1486
          %1670 = vmatpush.bf16.msra.mxu0 %v1484
          %1671 = vmatmul.bf16.gmra.mxu0 %v1217
          %v1672 = vpop.f32.mrf.mxu0
          %v1673 = vadd.f32 %v1288, %v1672
          %v1674 = vpop.f32.mrf.mxu0
          %1675 = vdwg.mxu0
          %1676 = vmatpush.bf16.msra.mxu0 %v1514
          %1677 = vmatpush.bf16.msra.mxu0 %v1512
          %1678 = vmatpush.bf16.msra.mxu0 %v1510
          %1679 = vmatpush.bf16.msra.mxu0 %v1508
          %1680 = vmatpush.bf16.msra.mxu0 %v1506
          %1681 = vmatpush.bf16.msra.mxu0 %v1504
          %1682 = vmatpush.bf16.msra.mxu0 %v1502
          %1683 = vmatpush.bf16.msra.mxu0 %v1500
          %1684 = vmatmul.bf16.gmra.mxu0 %v1218
          %v1685 = vpop.f32.mrf.mxu0
          %v1686 = vadd.f32 %v1673, %v1685
          %v1687 = vpop.f32.mrf.mxu0
          %1688 = vdwg.mxu0
          %1689 = vmatpush.bf16.msra.mxu0 %v1530
          %1690 = vmatpush.bf16.msra.mxu0 %v1528
          %1691 = vmatpush.bf16.msra.mxu0 %v1526
          %1692 = vmatpush.bf16.msra.mxu0 %v1524
          %1693 = vmatpush.bf16.msra.mxu0 %v1522
          %1694 = vmatpush.bf16.msra.mxu0 %v1520
          %1695 = vmatpush.bf16.msra.mxu0 %v1518
          %1696 = vmatpush.bf16.msra.mxu0 %v1516
          %1697 = vmatmul.bf16.gmra.mxu0 %v1219
          %v1698 = vpop.f32.mrf.mxu0
          %v1699 = vadd.f32 %v1686, %v1698
          %v1700 = vpop.f32.mrf.mxu0
          %1701 = vdwg.mxu0
          %1702 = vmatpush.bf16.msra.mxu0 %v1546
          %1703 = vmatpush.bf16.msra.mxu0 %v1544
          %1704 = vmatpush.bf16.msra.mxu0 %v1542
          %1705 = vmatpush.bf16.msra.mxu0 %v1540
          %1706 = vmatpush.bf16.msra.mxu0 %v1538
          %1707 = vmatpush.bf16.msra.mxu0 %v1536
          %1708 = vmatpush.bf16.msra.mxu0 %v1534
          %1709 = vmatpush.bf16.msra.mxu0 %v1532
          %1710 = vmatmul.bf16.gmra.mxu0 %v1220
          %v1711 = vpop.f32.mrf.mxu0
          %v1712 = vadd.f32 %v1699, %v1711
          %v1713 = vpop.f32.mrf.mxu0
          %1714 = vdwg.mxu0
          %v1715 = vmax.f32 %v1660, 0.0
          %v1716 = vmax.f32 %v1712, 0.0
          %s1717 = smul.u32 %s1182, 2
          %s1718 = smul.addr %s1717, 8
          %s1719 = scalar_lea.vmem [#allocation8], %s1718
          %1720 = vst [vmem:[%s1719] sm:$0xff] %v1715
          %1721 = vst [vmem:[%s1719 + $0x8] sm:$0xff] %v1716
          // Predicated region
          $region109: #{tpu_custom_call.1} parent=103 // pred_check
            %p1722 = pneg %p321
          $region110: #{tpu_custom_call.1} parent=103 // pred_check_branch
            %1724 = sbr.rel (%p1722) target = $region112
          $region111: #{tpu_custom_call.1} parent=103 // pred_region
            %1725 = vst [vmem:[#allocation11] sm:$0xf] 0.0
          $region112: #{tpu_custom_call.1} parent=103 // pred_fallthru
            _
          %v1726 = vld [vmem:[#allocation11] ss:$2 sm:$0x3]
          %v1727 = vrot.slane %v1715, 4
          %v1728 = vadd.f32 %v1715, %v1727
          %v1729 = vrot.slane %v1728, 2
          %v1730 = vadd.f32 %v1728, %v1729
          %v1731 = vrot.slane %v1730, 1
          %v1732 = vadd.f32 %v1730, %v1731
          %v1733 = vrot.slane %v1716, 4
          %v1734 = vadd.f32 %v1716, %v1733
          %v1735 = vrot.slane %v1734, 2
          %v1736 = vadd.f32 %v1734, %v1735
          %v1737 = vrot.slane %v1736, 1
          %v1738 = vadd.f32 %v1736, %v1737
          %v1741 = vrot.slane %v1738, 7
          %vm1742 = vcmask 1040384
          %v1743 = vsel %vm1742, %v1732, %v1741
          %v1745 = vadd.f32 %v1726, %v1743
          %v1746 = vlaneseq
          %vm1747 = vcmp.ge.s32.totalorder %v1746, 0
          %vm1748 = vcmp.lt.s32.totalorder %v1746, 256
          %vm1749 = vmand %vm1747, %vm1748
          %1750 = vst.msk [vmem:[#allocation11] ss:$2 sm:$0x3] %vm1749, %v1745
          %s1751 = scalar_lea.vmem [#allocation11], 1
          %v1752 = vld [vmem:[%s1751] ss:$2 sm:$0x3]
          %v1753 = vmul.f32 %v1715, %v1715
          %v1754 = vmul.f32 %v1716, %v1716
          %v1755 = vrot.slane %v1753, 4
          %v1756 = vadd.f32 %v1753, %v1755
          %v1757 = vrot.slane %v1756, 2
          %v1758 = vadd.f32 %v1756, %v1757
          %v1759 = vrot.slane %v1758, 1
          %v1760 = vadd.f32 %v1758, %v1759
          %v1761 = vrot.slane %v1754, 4
          %v1762 = vadd.f32 %v1754, %v1761
          %v1763 = vrot.slane %v1762, 2
          %v1764 = vadd.f32 %v1762, %v1763
          %v1765 = vrot.slane %v1764, 1
          %v1766 = vadd.f32 %v1764, %v1765
          %v1769 = vrot.slane %v1766, 7
          %v1770 = vsel %vm1742, %v1760, %v1769
          %v1772 = vadd.f32 %v1752, %v1770
          %1773 = vst.msk [vmem:[%s1751] ss:$2 sm:$0x3] %vm1749, %v1772
        $region104: #{tpu_custom_call.1} parent=43 // pred_fallthru
          _
        %p1774 = scmp.eq.s32.totalorder %s28, 3
        // Predicated region
        $region113: #{tpu_custom_call.1} parent=43 // pred_check
          %p1775 = pneg %p1774
        $region114: #{tpu_custom_call.1} parent=43 // pred_check_branch
          %1777 = sbr.rel (%p1775) target = $region116
        $region115: #{tpu_custom_call.1} parent=43 // pred_region
          // Predicated region
          $region117: #{tpu_custom_call.1} parent=115 // pred_check
            %p1778 = pneg %p321
          $region118: #{tpu_custom_call.1} parent=115 // pred_check_branch
            %1780 = sbr.rel (%p1778) target = $region120
          $region119: #{tpu_custom_call.1} parent=115 // pred_region
            %s1781 = scalar_lea.sflag [#allocation5], 2
            %s1782 = smul.u32 4, 32
            %s1783 = smul.u32 %s1782, 1
            %s1784 = sshll.u32 %s1783, 4
            %1785 = dma.done %s1781, %s1784
          $region120: #{tpu_custom_call.1} parent=115 // pred_fallthru
            _
          %v1786 = vld [vmem:[#allocation11] ss:$2 sm:$0x3]
          %v1787 = vmul.f32 %v1786, 0.125
          %s1788 = scalar_lea.vmem [#allocation11], 1
          %v1789 = vld [vmem:[%s1788] ss:$2 sm:$0x3]
          %v1790 = vmul.f32 %v1789, 0.125
          %v1791 = vmul.f32 %v1787, %v1787
          %v1792 = vsub.f32 %v1790, %v1791
          %s1793 = scalar_lea.vmem [#allocation20], 1
          %v1794 = vld [vmem:[%s1793] ss:$4 sm:$0x3]
          %v1795 = vadd.f32 %v1792, 1e-05
          %v1796 = vrsqrt.pop %v1795
          %v1797 = vmul.f32 %v1796, %v1795
          %v1798 = vmul.f32 %v1797, %v1796
          %v1799 = vmul.f32 0.5, %v1798
          %v1800 = vsub.f32 1.5, %v1799
          %v1801 = vmul.f32 %v1796, %v1800
          %vm1802 = vweird.f32 %v1795
          %vm1803 = vweird.f32 %v1796
          %vm1804 = vmor %vm1802, %vm1803
          %v1805 = vsel %vm1804, %v1796, %v1801
          %v1806 = vmul.f32 %v1794, %v1805
          %s1807 = scalar_lea.vmem [#allocation20], 2
          %v1808 = vld [vmem:[%s1807] ss:$4 sm:$0x3]
          %v1809 = vmul.f32 %v1787, %v1806
          %v1810 = vsub.f32 %v1808, %v1809
          %s1811 = sshra.s32 %s319, 3
          %s1812 = sand.u32 %s319, 7
          %s1813 = smul.u32 %s1811, 2
          %s1814 = smul.addr %s1813, 8
          %s1815 = scalar_lea.vmem [#allocation8], %s1814
          %v1816 = vld [vmem:[%s1815] sm:$0xff]
          %v1817 = vld [vmem:[%s1815 + $0x8] sm:$0xff]
          %v1819 = vperm.slane %v1806, 0
          %v1820 = vperm.slane %v1806, 1
          %v1823 = vmul.f32 %v1816, %v1819
          %v1824 = vmul.f32 %v1817, %v1820
          %v1826 = vperm.slane %v1810, 0
          %v1827 = vperm.slane %v1810, 1
          %v1830 = vadd.f32 %v1823, %v1826
          %v1831 = vadd.f32 %v1824, %v1827
          %v1832 = vpack.c.bf16 %v1830, %v1830
          %v1833 = vpack.c.bf16 %v1831, %v1831
          %v1834 = vld [vmem:[#allocation4] sm:$0xf]
          %v1835 = vld [vmem:[#allocation4 + $0x4] sm:$0xf]
          %v1836 = vld [vmem:[#allocation4 + $0x8] sm:$0xf]
          %v1837 = vld [vmem:[#allocation4 + $0xc] sm:$0xf]
          %v1838 = vld [vmem:[#allocation4 + $0x10] sm:$0xf]
          %v1839 = vld [vmem:[#allocation4 + $0x14] sm:$0xf]
          %v1840 = vld [vmem:[#allocation4 + $0x18] sm:$0xf]
          %v1841 = vld [vmem:[#allocation4 + $0x1c] sm:$0xf]
          %v1842 = vld [vmem:[#allocation4 + $0x20] sm:$0xf]
          %v1843 = vld [vmem:[#allocation4 + $0x24] sm:$0xf]
          %v1844 = vld [vmem:[#allocation4 + $0x28] sm:$0xf]
          %v1845 = vld [vmem:[#allocation4 + $0x2c] sm:$0xf]
          %v1846 = vld [vmem:[#allocation4 + $0x30] sm:$0xf]
          %v1847 = vld [vmem:[#allocation4 + $0x34] sm:$0xf]
          %v1848 = vld [vmem:[#allocation4 + $0x38] sm:$0xf]
          %v1849 = vld [vmem:[#allocation4 + $0x3c] sm:$0xf]
          %v1850 = vld [vmem:[#allocation4 + $0x40] sm:$0xf]
          %v1851 = vld [vmem:[#allocation4 + $0x44] sm:$0xf]
          %v1852 = vld [vmem:[#allocation4 + $0x48] sm:$0xf]
          %v1853 = vld [vmem:[#allocation4 + $0x4c] sm:$0xf]
          %v1854 = vld [vmem:[#allocation4 + $0x50] sm:$0xf]
          %v1855 = vld [vmem:[#allocation4 + $0x54] sm:$0xf]
          %v1856 = vld [vmem:[#allocation4 + $0x58] sm:$0xf]
          %v1857 = vld [vmem:[#allocation4 + $0x5c] sm:$0xf]
          %v1858 = vld [vmem:[#allocation4 + $0x60] sm:$0xf]
          %v1859 = vld [vmem:[#allocation4 + $0x64] sm:$0xf]
          %v1860 = vld [vmem:[#allocation4 + $0x68] sm:$0xf]
          %v1861 = vld [vmem:[#allocation4 + $0x6c] sm:$0xf]
          %v1862 = vld [vmem:[#allocation4 + $0x70] sm:$0xf]
          %v1863 = vld [vmem:[#allocation4 + $0x74] sm:$0xf]
          %v1864 = vld [vmem:[#allocation4 + $0x78] sm:$0xf]
          %v1865 = vld [vmem:[#allocation4 + $0x7c] sm:$0xf]
          %v1866 = vld [vmem:[%s8] sm:$0x1]
          %v1868 = vperm.slane %v1866, 0
          %v1902 = vunpack.c.l.b16 %v1834
          %v1903 = vunpack.c.l.b16 %v1835
          %v1904 = vunpack.c.l.b16 %v1836
          %v1905 = vunpack.c.l.b16 %v1837
          %v1906 = vunpack.c.l.b16 %v1838
          %v1907 = vunpack.c.l.b16 %v1839
          %v1908 = vunpack.c.l.b16 %v1840
          %v1909 = vunpack.c.l.b16 %v1841
          %v1910 = vunpack.c.l.b16 %v1842
          %v1911 = vunpack.c.l.b16 %v1843
          %v1912 = vunpack.c.l.b16 %v1844
          %v1913 = vunpack.c.l.b16 %v1845
          %v1914 = vunpack.c.l.b16 %v1846
          %v1915 = vunpack.c.l.b16 %v1847
          %v1916 = vunpack.c.l.b16 %v1848
          %v1917 = vunpack.c.l.b16 %v1849
          %v1918 = vunpack.c.l.b16 %v1850
          %v1919 = vunpack.c.l.b16 %v1851
          %v1920 = vunpack.c.l.b16 %v1852
          %v1921 = vunpack.c.l.b16 %v1853
          %v1922 = vunpack.c.l.b16 %v1854
          %v1923 = vunpack.c.l.b16 %v1855
          %v1924 = vunpack.c.l.b16 %v1856
          %v1925 = vunpack.c.l.b16 %v1857
          %v1926 = vunpack.c.l.b16 %v1858
          %v1927 = vunpack.c.l.b16 %v1859
          %v1928 = vunpack.c.l.b16 %v1860
          %v1929 = vunpack.c.l.b16 %v1861
          %v1930 = vunpack.c.l.b16 %v1862
          %v1931 = vunpack.c.l.b16 %v1863
          %v1932 = vunpack.c.l.b16 %v1864
          %v1933 = vunpack.c.l.b16 %v1865
          %v1934 = vpack.c.b16 %v1903, %v1902
          %v1935 = vpack.c.b16 %v1905, %v1904
          %v1936 = vpack.c.b16 %v1907, %v1906
          %v1937 = vpack.c.b16 %v1909, %v1908
          %v1938 = vpack.c.b16 %v1911, %v1910
          %v1939 = vpack.c.b16 %v1913, %v1912
          %v1940 = vpack.c.b16 %v1915, %v1914
          %v1941 = vpack.c.b16 %v1917, %v1916
          %v1942 = vpack.c.b16 %v1919, %v1918
          %v1943 = vpack.c.b16 %v1921, %v1920
          %v1944 = vpack.c.b16 %v1923, %v1922
          %v1945 = vpack.c.b16 %v1925, %v1924
          %v1946 = vpack.c.b16 %v1927, %v1926
          %v1947 = vpack.c.b16 %v1929, %v1928
          %v1948 = vpack.c.b16 %v1931, %v1930
          %v1949 = vpack.c.b16 %v1933, %v1932
          %1966 = vmatpush.bf16.msra.mxu0 %v1941
          %1967 = vmatpush.bf16.msra.mxu0 %v1940
          %1968 = vmatpush.bf16.msra.mxu0 %v1939
          %1969 = vmatpush.bf16.msra.mxu0 %v1938
          %1970 = vmatpush.bf16.msra.mxu0 %v1937
          %1971 = vmatpush.bf16.msra.mxu0 %v1936
          %1972 = vmatpush.bf16.msra.mxu0 %v1935
          %1973 = vmatpush.bf16.msra.mxu0 %v1934
          %1974 = vmatmul.bf16.gmra.mxu0 %v1832
          %v1975 = vpop.f32.mrf.mxu0
          %v1976 = vadd.f32 %v1868, %v1975
          %v1977 = vpop.f32.mrf.mxu0
          %1978 = vdwg.mxu0
          %1979 = vmatpush.bf16.msra.mxu0 %v1949
          %1980 = vmatpush.bf16.msra.mxu0 %v1948
          %1981 = vmatpush.bf16.msra.mxu0 %v1947
          %1982 = vmatpush.bf16.msra.mxu0 %v1946
          %1983 = vmatpush.bf16.msra.mxu0 %v1945
          %1984 = vmatpush.bf16.msra.mxu0 %v1944
          %1985 = vmatpush.bf16.msra.mxu0 %v1943
          %1986 = vmatpush.bf16.msra.mxu0 %v1942
          %1987 = vmatmul.bf16.gmra.mxu0 %v1833
          %v1988 = vpop.f32.mrf.mxu0
          %v1989 = vadd.f32 %v1976, %v1988
          %v1990 = vpop.f32.mrf.mxu0
          %1991 = vdwg.mxu0
          %1992 = vst [vmem:[#allocation21] sm:$0xff] %v1989
        $region116: #{tpu_custom_call.1} parent=43 // pred_fallthru
          _
        // Predicated region
        $region121: #{tpu_custom_call.1} parent=43 // pred_check
          %p1993 = pneg %p185
        $region122: #{tpu_custom_call.1} parent=43 // pred_check_branch
          %1995 = sbr.rel (%p1993) target = $region124
        $region123: #{tpu_custom_call.1} parent=43 // pred_region
          %1997 = vsyncadd [#allocation14], 0
          %s1998 = smul.addr %s29, 8
          %s1999 = scalar_lea.hbm %s9, %s1998
          %s2001 = sshll.u32 [#allocation21], 4
          %s2002 = int_to_ptr.vmem [resolvable:$true] %s2001
          %s2003 = sshll.u32 %s1999, 4
          %s2004 = int_to_ptr.hbm [resolvable:$true] %s2003
          %2006 = dma.vmem_to_hbm [thread:$0]  %s2002, 128, %s2004, [#allocation14]
        $region124: #{tpu_custom_call.1} parent=43 // pred_fallthru
          _
        // Predicated region
        $region125: #{tpu_custom_call.1} parent=43 // pred_check
          %p2007 = pneg %p185
        $region126: #{tpu_custom_call.1} parent=43 // pred_check_branch
          %2009 = sbr.rel (%p2007) target = $region128
        $region127: #{tpu_custom_call.1} parent=43 // pred_region
          %2011 = dma.done [#allocation14], 128
        $region128: #{tpu_custom_call.1} parent=43 // pred_fallthru
          _
      $region44: #{tpu_custom_call.1} parent=5 // pred_fallthru
        _
      %p2012 = scmp.le.s32.totalorder 2, %s19
      // Predicated region
      $region129: #{tpu_custom_call.1} parent=5 // pred_check
        %p2013 = pneg %p2012
      $region130: #{tpu_custom_call.1} parent=5 // pred_check_branch
        %2015 = sbr.rel (%p2013) target = $region132
      $region131: #{tpu_custom_call.1} parent=5 // pred_region
        %s2016 = ssub.s32 %s19, 2
      $region132: #{tpu_custom_call.1} parent=5 // pred_fallthru
        _
    $region6: #{tpu_custom_call.1} parent=1 // loop_footer
      %s23 = sadd.s32 1, %s19
    $region7: #{tpu_custom_call.1} parent=1 // loop_footer_branch
      %18 = sbr.rel target = $region3
    $region8: #{tpu_custom_call.1} parent=1 // loop_exit
      _
    %2017 = vsyncpa [#allocation13], 1
    %s2018 = scalar_lea.sflag [#allocation13], 1
    %2019 = vsyncpa %s2018, 1
    %2020 = vsyncpa [#allocation16], 1
    %2021 = vsyncpa [#allocation19], 1
    %2022 = vsyncpa [#allocation14], 1
    %s2023 = scalar_lea.sflag [#allocation14], 1
    %2024 = vsyncpa %s2023, 1
  %2025 = vsyncmov [#allocation5]
  %s2026 = vpop.sfrf %2025
  %p2027 = scmp.eq.s32.totalorder %s2026, 0
  %p2028 = pneg %p2027
  %2030 = shalt.err (%p2028)
  %s2031 = scalar_lea.sflag [#allocation5], 1
  %2032 = vsyncmov %s2031
  %s2033 = vpop.sfrf %2032
  %p2034 = scmp.eq.s32.totalorder %s2033, 0
  %p2035 = pneg %p2034
  %2037 = shalt.err (%p2035)
  %s2038 = scalar_lea.sflag [#allocation5], 2
  %2039 = vsyncmov %s2038
  %s2040 = vpop.sfrf %2039
  %p2041 = scmp.eq.s32.totalorder %s2040, 0
  %p2042 = pneg %p2041
  %2044 = shalt.err (%p2042)

</llo_original>
